<compile_context>
chip_gen: v7x
topology: tpu7x:2x2x1
jax: 0.10.0
libtpu: 0.0.40
codegen_flags: <defaults>
</compile_context>

<pallas_src>
import functools

import jax
import jax.numpy as jnp
from jax import lax
from jax.experimental import pallas as pl
from jax.experimental.pallas import tpu as pltpu


# ----------------------------------------------------------------------------- kernel
def _stream_kernel(x_ref, w1_ref, w2_ref, vec_ref, o_ref, *, eps, d_model, d_ff):
    """One grid step = one stream: o = relu((x + LN(x)) @ W1 + b1) @ W2 + b2.

    x_ref  : (M, D)        activations (fp32)
    w1_ref : (D, d_ff)     pre-transposed bf16
    w2_ref : (d_ff, D)     pre-transposed bf16
    vec_ref: (1, 3D+d_ff)  packed [gamma | beta | b1 | b2] (fp32, 128-aligned slices)
    """
    x = x_ref[...].astype(jnp.float32)                               # (M, D)

    # Packed small-vector slab; every slice boundary is a multiple of 128 lanes.
    g  = vec_ref[:, 0:d_model]
    b  = vec_ref[:, d_model:2 * d_model]
    b1 = vec_ref[:, 2 * d_model:2 * d_model + d_ff]
    b2 = vec_ref[:, 2 * d_model + d_ff:3 * d_model + d_ff]

    # LayerNorm + residual: fp32 throughout (v5e VPU has no bf16 VALU).
    mu = jnp.mean(x, axis=-1, keepdims=True)
    var = jnp.mean(jnp.square(x - mu), axis=-1, keepdims=True)
    ln = (x - mu) * lax.rsqrt(var + eps) * g + b
    y = (x + ln).astype(jnp.bfloat16)                                # MXU operand

    # MXU matmuls: bf16 operands, fp32 accumulation.
    h = jnp.dot(y, w1_ref[...], preferred_element_type=jnp.float32) + b1
    h = jnp.maximum(h, 0.0).astype(jnp.bfloat16)                     # relu, bf16 early
    out = jnp.dot(h, w2_ref[...], preferred_element_type=jnp.float32) + b2
    o_ref[...] = out.astype(o_ref.dtype)


# ----------------------------------------------------------------------------- one-time param prep (hoisted out of the forward path)
def prepare_params(P):
    """Transpose, cast to bf16, stack the two streams, and pack the small vectors.

    Call once at init time; the forward path passes the result straight through.
    Stream 0 = image (LN2 / FFN2), stream 1 = prompt (LN1 / FFN1).
    """
    def stream(ln_g, ln_b, ffn):
        w1t = ffn["w1"].T.astype(jnp.bfloat16)                       # (D, d_ff)
        w2t = ffn["w2"].T.astype(jnp.bfloat16)                       # (d_ff, D)
        vec = jnp.concatenate([ln_g, ln_b, ffn["b1"], ffn["b2"]]).astype(jnp.float32)
        return w1t, w2t, vec[None, :]                                # (1, 3D+d_ff)

    w1_i, w2_i, v_i = stream(P["ln2_g"], P["ln2_b"], P["ffn2"])      # image stream
    w1_p, w2_p, v_p = stream(P["ln1_g"], P["ln1_b"], P["ffn1"])      # prompt stream
    return {
        "w1": jnp.stack([w1_i, w1_p]),                               # (2, D, d_ff)  bf16
        "w2": jnp.stack([w2_i, w2_p]),                               # (2, d_ff, D)  bf16
        "vec": jnp.stack([v_i, v_p]),                                # (2, 1, 3D+d_ff) f32
    }


# ----------------------------------------------------------------------------- wrapper
def cross_attention_layer_forward(image, prompt, Pk, *, eps=1e-5):
    """Mirrors CrossAttentionLayer.forward(image, prompt) (eval mode)."""
    B, L_img, D = image.shape
    _, L_prm, _ = prompt.shape
    d_ff = Pk["w1"].shape[-1]
    vec_w = Pk["vec"].shape[-1]

    m_img, m_prm = B * L_img, B * L_prm
    M = max(m_img, m_prm)
    M = ((M + 7) // 8) * 8                                           # sublane-align rows

    def slab(x, m):
        x2 = x.reshape(m, D)
        if m < M:
            x2 = jnp.pad(x2, ((0, M - m), (0, 0)))                   # pad rows (sliced off later)
        return x2

    x_s = jnp.stack([slab(image, m_img), slab(prompt, m_prm)])       # (2, M, D)

    kern = functools.partial(_stream_kernel, eps=eps, d_model=D, d_ff=d_ff)

    cost = pl.CostEstimate(
        flops=2 * M * 4 * D * d_ff,                                  # 2 streams x 2 matmuls
        transcendentals=2 * M,                                       # rsqrt per row
        bytes_accessed=(Pk["w1"].size + Pk["w2"].size) * 2           # bf16 weights
                       + Pk["vec"].size * 4                          # packed vectors
                       + 2 * (2 * M * D) * 4,                        # activations in+out
    )

    out = pl.pallas_call(
        kern,
        out_shape=jax.ShapeDtypeStruct((2, M, D), image.dtype),
        grid_spec=pltpu.PrefetchScalarGridSpec(
            num_scalar_prefetch=0,
            grid=(2,),                                               # one step per stream
            in_specs=[
                pl.BlockSpec((None, M, D), lambda s: (s, 0, 0)),     # activations
                pl.BlockSpec((None, D, d_ff), lambda s: (s, 0, 0)),  # W1 (pre-T, bf16)
                pl.BlockSpec((None, d_ff, D), lambda s: (s, 0, 0)),  # W2 (pre-T, bf16)
                pl.BlockSpec((None, 1, vec_w), lambda s: (s, 0, 0)), # packed gamma/beta/b1/b2
            ],
            out_specs=pl.BlockSpec((None, M, D), lambda s: (s, 0, 0)),
        ),
        compiler_params=pltpu.CompilerParams(
            dimension_semantics=("parallel",)),                      # v7x: one stream per TC
        cost_estimate=cost,
    )(x_s, Pk["w1"], Pk["w2"], Pk["vec"])

    image_out = out[0, :m_img].reshape(B, L_img, D)
    prompt_out = out[1, :m_prm].reshape(B, L_prm, D)
    return image_out, prompt_out


# ----------------------------------------------------------------------------- pure-JAX reference
def ref_ln_res_ffn(x, g, b, ffn, eps=1e-5):
    mu = x.mean(-1, keepdims=True)
    var = ((x - mu) ** 2).mean(-1, keepdims=True)
    y = x + ((x - mu) / jnp.sqrt(var + eps) * g + b)
    h = jnp.maximum(y @ ffn["w1"].T + ffn["b1"], 0.0)
    return h @ ffn["w2"].T + ffn["b2"]


def ref_forward(image, prompt, P):
    image_o = ref_ln_res_ffn(image, P["ln2_g"], P["ln2_b"], P["ffn2"])
    prompt_o = ref_ln_res_ffn(prompt, P["ln1_g"], P["ln1_b"], P["ffn1"])
    return image_o, prompt_o


# ----------------------------------------------------------------------------- params
def init_params(key, d_model, d_ff):
    ks = iter(jax.random.split(key, 16))
    rnd = lambda shape, s=0.05: (s * jax.random.normal(next(ks), shape)).astype(jnp.float32)
    ffn = lambda: {"w1": rnd((d_ff, d_model)), "b1": rnd((d_ff,)),
                   "w2": rnd((d_model, d_ff)), "b2": rnd((d_model,))}
    return {
        "ln1_g": (1.0 + 0.1 * jax.random.normal(next(ks), (d_model,))).astype(jnp.float32),
        "ln1_b": rnd((d_model,), 0.1),
        "ln2_g": (1.0 + 0.1 * jax.random.normal(next(ks), (d_model,))).astype(jnp.float32),
        "ln2_b": rnd((d_model,), 0.1),
        "ffn1": ffn(),
        "ffn2": ffn(),
    }


# ----------------------------------------------------------------------------- main
if __name__ == "__main__":
    # Module defaults: d_model=256 (lane-dense: 2 * 128 lanes), d_ff = 4 * d_model.
    B, L_img, L_prompt, D = 2, 16, 8, 256
    d_ff = 4 * D

    key = jax.random.PRNGKey(0)
    k_img, k_prm, k_par = jax.random.split(key, 3)
    image = jax.random.normal(k_img, (B, L_img, D), jnp.float32)
    prompt = jax.random.normal(k_prm, (B, L_prompt, D), jnp.float32)
    P = init_params(k_par, D, d_ff)

    # One-time weight prep (transpose / bf16 cast / stack / pack) -- NOT per call.
    Pk = jax.tree.map(jax.block_until_ready, prepare_params(P))

    fwd = jax.jit(cross_attention_layer_forward)
    image_out, prompt_out = fwd(image, prompt, Pk)
    jax.block_until_ready((image_out, prompt_out))

    # Check against a pure-fp32 JAX reference (tolerance covers bf16 MXU operands).
    image_ref, prompt_ref = ref_forward(image, prompt, P)
    assert image_out.shape == (B, L_img, D) and prompt_out.shape == (B, L_prompt, D)
    assert jnp.allclose(image_out, image_ref, atol=3e-2, rtol=3e-2)
    assert jnp.allclose(prompt_out, prompt_ref, atol=3e-2, rtol=3e-2)

    print("KERNEL_OK")
</pallas_src>

<mosaic_0001>
module attributes {stable_mosaic.version = 11 : i64} {
  func.func @_stream_kernel(%arg0: i32, %arg1: memref<1x32x256xf32, #tpu.memory_space<vmem>>, %arg2: memref<1x256x1024xbf16, #tpu.memory_space<vmem>>, %arg3: memref<1x1024x256xbf16, #tpu.memory_space<vmem>>, %arg4: memref<1x1x1792xf32, #tpu.memory_space<vmem>>, %arg5: memref<1x32x256xf32, #tpu.memory_space<vmem>>) attributes {dimension_semantics = [#tpu.dimension_semantics<parallel>], iteration_bounds = array<i64: 2>, scalar_prefetch = 0 : i64, scratch_operands = 0 : i64, tpu.core_type = #tpu.core_type<tc>, window_params = [{transform_indices = @transform_0, window_bounds = array<i64: 1, 32, 256>}, {transform_indices = @transform_1, window_bounds = array<i64: 1, 256, 1024>}, {transform_indices = @transform_2, window_bounds = array<i64: 1, 1024, 256>}, {transform_indices = @transform_3, window_bounds = array<i64: 1, 1, 1792>}, {transform_indices = @transform_4, window_bounds = array<i64: 1, 32, 256>}]} {
    %c0 = arith.constant 0 : index
    %c0_0 = arith.constant 0 : index
    %c0_1 = arith.constant 0 : index
    %0 = vector.load %arg1[%c0, %c0_0, %c0_1] : memref<1x32x256xf32, #tpu.memory_space<vmem>>, vector<1x32x256xf32>
    %1 = vector.shape_cast %0 : vector<1x32x256xf32> to vector<32x256xf32>
    %c0_2 = arith.constant 0 : index
    %c0_3 = arith.constant 0 : index
    %c0_4 = arith.constant 0 : index
    %2 = vector.load %arg4[%c0_2, %c0_3, %c0_4] : memref<1x1x1792xf32, #tpu.memory_space<vmem>>, vector<1x1x256xf32>
    %3 = vector.shape_cast %2 : vector<1x1x256xf32> to vector<1x256xf32>
    %c0_5 = arith.constant 0 : index
    %c0_6 = arith.constant 0 : index
    %c256 = arith.constant 256 : index
    %4 = vector.load %arg4[%c0_5, %c0_6, %c256] : memref<1x1x1792xf32, #tpu.memory_space<vmem>>, vector<1x1x256xf32>
    %5 = vector.shape_cast %4 : vector<1x1x256xf32> to vector<1x256xf32>
    %c0_7 = arith.constant 0 : index
    %c0_8 = arith.constant 0 : index
    %c512 = arith.constant 512 : index
    %6 = vector.load %arg4[%c0_7, %c0_8, %c512] : memref<1x1x1792xf32, #tpu.memory_space<vmem>>, vector<1x1x1024xf32>
    %7 = vector.shape_cast %6 : vector<1x1x1024xf32> to vector<1x1024xf32>
    %c0_9 = arith.constant 0 : index
    %c0_10 = arith.constant 0 : index
    %c1536 = arith.constant 1536 : index
    %8 = vector.load %arg4[%c0_9, %c0_10, %c1536] : memref<1x1x1792xf32, #tpu.memory_space<vmem>>, vector<1x1x256xf32>
    %9 = vector.shape_cast %8 : vector<1x1x256xf32> to vector<1x256xf32>
    %cst = arith.constant dense<0.000000e+00> : vector<32xf32>
    %10 = vector.multi_reduction <add>, %1, %cst [1] : vector<32x256xf32> to vector<32xf32>
    %11 = vector.shape_cast %10 : vector<32xf32> to vector<32x1xf32>
    %cst_11 = arith.constant 2.560000e+02 : f32
    %12 = vector.broadcast %cst_11 : f32 to vector<32x1xf32>
    %13 = arith.divf %11, %12 : vector<32x1xf32>
    %14 = vector.broadcast %13 : vector<32x1xf32> to vector<32x256xf32>
    %15 = arith.subf %1, %14 : vector<32x256xf32>
    %16 = arith.mulf %15, %15 : vector<32x256xf32>
    %cst_12 = arith.constant dense<0.000000e+00> : vector<32xf32>
    %17 = vector.multi_reduction <add>, %16, %cst_12 [1] : vector<32x256xf32> to vector<32xf32>
    %18 = vector.shape_cast %17 : vector<32xf32> to vector<32x1xf32>
    %cst_13 = arith.constant 2.560000e+02 : f32
    %19 = vector.broadcast %cst_13 : f32 to vector<32x1xf32>
    %20 = arith.divf %18, %19 : vector<32x1xf32>
    %21 = vector.broadcast %13 : vector<32x1xf32> to vector<32x256xf32>
    %22 = arith.subf %1, %21 : vector<32x256xf32>
    %cst_14 = arith.constant 9.99999974E-6 : f32
    %23 = vector.broadcast %cst_14 : f32 to vector<32x1xf32>
    %24 = arith.addf %20, %23 : vector<32x1xf32>
    %25 = math.rsqrt %24 : vector<32x1xf32>
    %26 = vector.broadcast %25 : vector<32x1xf32> to vector<32x256xf32>
    %27 = arith.mulf %22, %26 : vector<32x256xf32>
    %28 = vector.broadcast %3 : vector<1x256xf32> to vector<32x256xf32>
    %29 = arith.mulf %27, %28 : vector<32x256xf32>
    %30 = vector.broadcast %5 : vector<1x256xf32> to vector<32x256xf32>
    %31 = arith.addf %29, %30 : vector<32x256xf32>
    %32 = arith.addf %1, %31 : vector<32x256xf32>
    %33 = arith.truncf %32 : vector<32x256xf32> to vector<32x256xbf16>
    %c0_15 = arith.constant 0 : index
    %c0_16 = arith.constant 0 : index
    %c0_17 = arith.constant 0 : index
    %34 = vector.load %arg2[%c0_15, %c0_16, %c0_17] : memref<1x256x1024xbf16, #tpu.memory_space<vmem>>, vector<1x256x1024xbf16>
    %35 = vector.shape_cast %34 : vector<1x256x1024xbf16> to vector<256x1024xbf16>
    %cst_18 = arith.constant dense<0.000000e+00> : vector<32x1024xf32>
    %36 = tpu.matmul %33, %35, %cst_18 {dimension_numbers = #tpu.dot_dimension_numbers<[1], [0], [0], [1], [0, 0, 1, 1], [], []>} : vector<32x256xbf16>, vector<256x1024xbf16>, vector<32x1024xf32> -> vector<32x1024xf32>
    %37 = vector.broadcast %7 : vector<1x1024xf32> to vector<32x1024xf32>
    %38 = arith.addf %36, %37 : vector<32x1024xf32>
    %cst_19 = arith.constant 0.000000e+00 : f32
    %39 = vector.broadcast %cst_19 : f32 to vector<32x1024xf32>
    %40 = arith.maximumf %38, %39 : vector<32x1024xf32>
    %41 = arith.truncf %40 : vector<32x1024xf32> to vector<32x1024xbf16>
    %c0_20 = arith.constant 0 : index
    %c0_21 = arith.constant 0 : index
    %c0_22 = arith.constant 0 : index
    %42 = vector.load %arg3[%c0_20, %c0_21, %c0_22] : memref<1x1024x256xbf16, #tpu.memory_space<vmem>>, vector<1x1024x256xbf16>
    %43 = vector.shape_cast %42 : vector<1x1024x256xbf16> to vector<1024x256xbf16>
    %cst_23 = arith.constant dense<0.000000e+00> : vector<32x256xf32>
    %44 = tpu.matmul %41, %43, %cst_23 {dimension_numbers = #tpu.dot_dimension_numbers<[1], [0], [0], [1], [0, 0, 1, 1], [], []>} : vector<32x1024xbf16>, vector<1024x256xbf16>, vector<32x256xf32> -> vector<32x256xf32>
    %45 = vector.broadcast %9 : vector<1x256xf32> to vector<32x256xf32>
    %46 = arith.addf %44, %45 : vector<32x256xf32>
    %c0_24 = arith.constant 0 : index
    %c0_25 = arith.constant 0 : index
    %c0_26 = arith.constant 0 : index
    %47 = vector.load %arg5[%c0_24, %c0_25, %c0_26] : memref<1x32x256xf32, #tpu.memory_space<vmem>>, vector<1x32x256xf32>
    %48 = vector.shape_cast %47 : vector<1x32x256xf32> to vector<32x256xf32>
    %49 = vector.shape_cast %46 : vector<32x256xf32> to vector<1x32x256xf32>
    tpu.vector_store %arg5[%c0_24, %c0_25, %c0_26], %49 {strides = array<i32>} : memref<1x32x256xf32, #tpu.memory_space<vmem>>, vector<1x32x256xf32>,
    return
  }
  func.func @transform_0(%arg0: i32) -> (i32, i32, i32) {
    %c0_i32 = arith.constant 0 : i32
    %c0_i32_0 = arith.constant 0 : i32
    %c0_i32_1 = arith.constant 0 : i32
    return %arg0, %c0_i32, %c0_i32_0 : i32, i32, i32
  }
  func.func @transform_1(%arg0: i32) -> (i32, i32, i32) {
    %c0_i32 = arith.constant 0 : i32
    %c0_i32_0 = arith.constant 0 : i32
    %c0_i32_1 = arith.constant 0 : i32
    return %arg0, %c0_i32, %c0_i32_0 : i32, i32, i32
  }
  func.func @transform_2(%arg0: i32) -> (i32, i32, i32) {
    %c0_i32 = arith.constant 0 : i32
    %c0_i32_0 = arith.constant 0 : i32
    %c0_i32_1 = arith.constant 0 : i32
    return %arg0, %c0_i32, %c0_i32_0 : i32, i32, i32
  }
  func.func @transform_3(%arg0: i32) -> (i32, i32, i32) {
    %c0_i32 = arith.constant 0 : i32
    %c0_i32_0 = arith.constant 0 : i32
    %c0_i32_1 = arith.constant 0 : i32
    return %arg0, %c0_i32, %c0_i32_0 : i32, i32, i32
  }
  func.func @transform_4(%arg0: i32) -> (i32, i32, i32) {
    %c0_i32 = arith.constant 0 : i32
    %c0_i32_0 = arith.constant 0 : i32
    %c0_i32_1 = arith.constant 0 : i32
    return %arg0, %c0_i32, %c0_i32_0 : i32, i32, i32
  }
}

</mosaic_0001>

<llo_original>
// kernel: cross_attention_layer_forward.1
$region0: #{cross_attention_layer_forward.1}
  #allocation0 [shape = 'u32[]', space=smem, size = 0x4, offset = 0x4, fixed_abs, tag = 'smem constant byte address 0x4 - core index']
  #allocation1 [shape = 'u32[144,128]{1,0:T(1,128)}', space=vmem, size = 0x12000, scoped, tag = 'internal scratch']
  %s0 = inlined_call_operand.vmem [shape: f32[2,32,256], index: 0, kind: input, shape index: {}]
  %s1 = inlined_call_operand.hbm [shape: bf16[2,256,1024], index: 1, kind: input, shape index: {}]
  %s2 = inlined_call_operand.hbm [shape: bf16[2,1024,256], index: 2, kind: input, shape index: {}]
  %s3 = inlined_call_operand.vmem [shape: f32[2,1,1792], index: 3, kind: input, shape index: {}]
  %s4 = inlined_call_operand.vmem [shape: f32[2,32,256], index: 4, kind: output, shape index: {}]
  %s5 = sld [smem:[#allocation0]]
  $region57: #{cross_attention_layer_forward.1} parent=0
    _
  %s7 = ssub.s32 1, %s5
  %s8 = scalar_select 0, %s7, %s5
  $region1: #{cross_attention_layer_forward.1} parent=0
    #allocation2 [shape = 'u8[1048576]{0}', space=vmem, size = 0x100000, scoped, tag = 'input window, operand 1']
    #allocation3 [shape = 's32[2]{0}', space=sflag, size = 0x8, scoped, tag = 'scoped memory for cross_attention_layer_forward.1']
    #allocation4 [shape = 'u8[1048576]{0}', space=vmem, size = 0x100000, scoped, tag = 'input window, operand 2']
    #allocation5 [shape = 's32[2]{0}', space=sflag, size = 0x8, scoped, tag = 'scoped memory for cross_attention_layer_forward.1']
    %9 = vsyncpa [#allocation3], 0
    %s10 = scalar_lea.sflag [#allocation3], 1
    %11 = vsyncpa %s10, 0
    %12 = vsyncpa [#allocation5], 0
    %s13 = scalar_lea.sflag [#allocation5], 1
    %14 = vsyncpa %s13, 0
    loop: start=0, step=1, limit=4
    $region2: #{cross_attention_layer_forward.1} parent=1 // loop_pre_header
      _
    $region3: #{cross_attention_layer_forward.1} parent=1 // loop_header
      %s16 = sphi 0, %s20
      %p17 = scmp.ge.s32.totalorder %s16, 4
      %s26 = sphi 0, %s28
      %s29 = sphi 0, %s26
      %s30 = sphi 0, %s29
      %s46 = sphi 0, %s30
      %s52 = sphi 0, %s54
      %s55 = sphi 0, %s52
      %s56 = sphi 0, %s55
      %s72 = sphi 0, %s56
      %s78 = sphi 0, %s80
      %s81 = sphi 0, %s78
      %s82 = sphi 0, %s81
      %s98 = sphi 0, %s82
      %s104 = sphi 0, %s106
      %s107 = sphi 0, %s104
      %s108 = sphi 0, %s107
      %s124 = sphi 0, %s108
      %s130 = sphi 0, %s132
      %s133 = sphi 0, %s130
      %s134 = sphi 0, %s133
      %s150 = sphi 0, %s134
    $region4: #{cross_attention_layer_forward.1} parent=1 // loop_header_branch
      %19 = sbr.rel (%p17) target = $region8
    $region5: #{cross_attention_layer_forward.1} parent=1 // loop_body
      %s21 = ssub.s32 %s16, 1
      %s22 = ssub.s32 %s16, 2
      %s23 = sadd.s32 %s16, 1
      %s24 = ssub.s32 %s16, %s23
      %p25 = scmp.eq.s32.totalorder %s24, 0
      %s27 = sadd.s32 %s26, 1
      %s28 = scalar_select %p25, %s26, %s27
      %p31 = pneg %p25
      %p32 = scmp.eq.s32.totalorder %s16, 1
      %p33 = por %p31, %p32
      %p34 = scmp.ne.s32.totalorder %s26, %s29
      %p35 = scmp.eq.s32.totalorder %s16, 0
      %p36 = por %p34, %p35
      %p37 = scmp.ne.s32.totalorder %s26, %s29
      %p38 = scmp.eq.s32.totalorder %s21, 1
      %p39 = por %p37, %p38
      %p40 = scmp.ne.s32.totalorder %s29, %s30
      %p41 = scmp.eq.s32.totalorder %s21, 0
      %p42 = por %p40, %p41
      %p43 = scmp.ne.s32.totalorder %s29, %s30
      %p44 = scmp.eq.s32.totalorder %s22, 1
      %p45 = por %p43, %p44
      %p47 = scmp.ne.s32.totalorder %s30, %s46
      %p48 = scmp.eq.s32.totalorder %s22, 0
      %p49 = por %p47, %p48
      %s50 = ssub.s32 %s16, %s23
      %p51 = scmp.eq.s32.totalorder %s50, 0
      %s53 = sadd.s32 %s52, 1
      %s54 = scalar_select %p51, %s52, %s53
      %p57 = pneg %p51
      %p58 = scmp.eq.s32.totalorder %s16, 1
      %p59 = por %p57, %p58
      %p60 = scmp.ne.s32.totalorder %s52, %s55
      %p61 = scmp.eq.s32.totalorder %s16, 0
      %p62 = por %p60, %p61
      %p63 = scmp.ne.s32.totalorder %s52, %s55
      %p64 = scmp.eq.s32.totalorder %s21, 1
      %p65 = por %p63, %p64
      %p66 = scmp.ne.s32.totalorder %s55, %s56
      %p67 = scmp.eq.s32.totalorder %s21, 0
      %p68 = por %p66, %p67
      %p69 = scmp.ne.s32.totalorder %s55, %s56
      %p70 = scmp.eq.s32.totalorder %s22, 1
      %p71 = por %p69, %p70
      %p73 = scmp.ne.s32.totalorder %s56, %s72
      %p74 = scmp.eq.s32.totalorder %s22, 0
      %p75 = por %p73, %p74
      %s76 = ssub.s32 %s16, %s23
      %p77 = scmp.eq.s32.totalorder %s76, 0
      %s79 = sadd.s32 %s78, 1
      %s80 = scalar_select %p77, %s78, %s79
      %p83 = pneg %p77
      %p84 = scmp.eq.s32.totalorder %s16, 1
      %p85 = por %p83, %p84
      %p86 = scmp.ne.s32.totalorder %s78, %s81
      %p87 = scmp.eq.s32.totalorder %s16, 0
      %p88 = por %p86, %p87
      %p89 = scmp.ne.s32.totalorder %s78, %s81
      %p90 = scmp.eq.s32.totalorder %s21, 1
      %p91 = por %p89, %p90
      %p92 = scmp.ne.s32.totalorder %s81, %s82
      %p93 = scmp.eq.s32.totalorder %s21, 0
      %p94 = por %p92, %p93
      %p95 = scmp.ne.s32.totalorder %s81, %s82
      %p96 = scmp.eq.s32.totalorder %s22, 1
      %p97 = por %p95, %p96
      %p99 = scmp.ne.s32.totalorder %s82, %s98
      %p100 = scmp.eq.s32.totalorder %s22, 0
      %p101 = por %p99, %p100
      %s102 = ssub.s32 %s16, %s23
      %p103 = scmp.eq.s32.totalorder %s102, 0
      %s105 = sadd.s32 %s104, 1
      %s106 = scalar_select %p103, %s104, %s105
      %p109 = pneg %p103
      %p110 = scmp.eq.s32.totalorder %s16, 1
      %p111 = por %p109, %p110
      %p112 = scmp.ne.s32.totalorder %s104, %s107
      %p113 = scmp.eq.s32.totalorder %s16, 0
      %p114 = por %p112, %p113
      %p115 = scmp.ne.s32.totalorder %s104, %s107
      %p116 = scmp.eq.s32.totalorder %s21, 1
      %p117 = por %p115, %p116
      %p118 = scmp.ne.s32.totalorder %s107, %s108
      %p119 = scmp.eq.s32.totalorder %s21, 0
      %p120 = por %p118, %p119
      %p121 = scmp.ne.s32.totalorder %s107, %s108
      %p122 = scmp.eq.s32.totalorder %s22, 1
      %p123 = por %p121, %p122
      %p125 = scmp.ne.s32.totalorder %s108, %s124
      %p126 = scmp.eq.s32.totalorder %s22, 0
      %p127 = por %p125, %p126
      %s128 = ssub.s32 %s16, %s23
      %p129 = scmp.eq.s32.totalorder %s128, 0
      %s131 = sadd.s32 %s130, 1
      %s132 = scalar_select %p129, %s130, %s131
      %p135 = pneg %p129
      %p136 = scmp.eq.s32.totalorder %s16, 1
      %p137 = por %p135, %p136
      %p138 = scmp.ne.s32.totalorder %s130, %s133
      %p139 = scmp.eq.s32.totalorder %s16, 0
      %p140 = por %p138, %p139
      %p141 = scmp.ne.s32.totalorder %s130, %s133
      %p142 = scmp.eq.s32.totalorder %s21, 1
      %p143 = por %p141, %p142
      %p144 = scmp.ne.s32.totalorder %s133, %s134
      %p145 = scmp.eq.s32.totalorder %s21, 0
      %p146 = por %p144, %p145
      %p147 = scmp.ne.s32.totalorder %s133, %s134
      %p148 = scmp.eq.s32.totalorder %s22, 1
      %p149 = por %p147, %p148
      %p151 = scmp.ne.s32.totalorder %s134, %s150
      %p152 = scmp.eq.s32.totalorder %s22, 0
      %p153 = por %p151, %p152
      %p154 = scmp.le.s32.totalorder 1, %s16
      %p155 = scmp.lt.s32.totalorder %s16, 3
      %p156 = pnand %p154, %p155
      %p157 = pneg %p156
      // Predicated region
      $region9: #{cross_attention_layer_forward.1} parent=5 // pred_check
        _
      $region10: #{cross_attention_layer_forward.1} parent=5 // pred_check_branch
        %159 = sbr.rel (%p156) target = $region12
      $region11: #{cross_attention_layer_forward.1} parent=5 // pred_region
        %s160 = ssub.s32 %s16, 1
      $region12: #{cross_attention_layer_forward.1} parent=5 // pred_fallthru
        _
      %p161 = scmp.lt.s32.totalorder %s16, 2
      // Predicated region
      $region13: #{cross_attention_layer_forward.1} parent=5 // pred_check
        %p162 = pneg %p161
      $region14: #{cross_attention_layer_forward.1} parent=5 // pred_check_branch
        %164 = sbr.rel (%p162) target = $region16
      $region15: #{cross_attention_layer_forward.1} parent=5 // pred_region
        // Predicated region
        $region17: #{cross_attention_layer_forward.1} parent=15 // pred_check
          %p165 = pneg %p36
        $region18: #{cross_attention_layer_forward.1} parent=15 // pred_check_branch
          %167 = sbr.rel (%p165) target = $region20
        $region19: #{cross_attention_layer_forward.1} parent=15 // pred_region
          %p168 = scmp.lt.s32.totalorder %s16, 1
          %s169 = scalar_select %p168, %s16, 1
          %s170 = smul.addr %s169, 8
          %s171 = smul.addr %s170, 8
          %s172 = scalar_lea.vmem %s0, %s171
        $region20: #{cross_attention_layer_forward.1} parent=15 // pred_fallthru
          _
        // Predicated region
        $region21: #{cross_attention_layer_forward.1} parent=15 // pred_check
          %p173 = pneg %p62
        $region22: #{cross_attention_layer_forward.1} parent=15 // pred_check_branch
          %175 = sbr.rel (%p173) target = $region24
        $region23: #{cross_attention_layer_forward.1} parent=15 // pred_region
          %s176 = sand.u32 %s52, 1
          %s177 = scalar_lea.sflag [#allocation3], %s176
          %s178 = sand.u32 %s52, 1
          %s179 = smul.addr %s178, 1024
          %s180 = scalar_lea.vmem [#allocation2], %s179
          %s182 = ssub.s32 16384, 16384
          %183 = vsyncadd %s177, %s182
          %s184 = smul.addr %s16, 256
          %s185 = smul.addr %s184, 64
          %s186 = scalar_lea.hbm %s1, %s185
          %s187 = sshll.u32 %s180, 4
          %s188 = int_to_ptr.vmem [resolvable:$true] %s187
          %193 = dma.hbm_to_vmem [thread:$0]  %s186, 16384, %s188, %s177, 512, 512, 32
        $region24: #{cross_attention_layer_forward.1} parent=15 // pred_fallthru
          _
        // Predicated region
        $region25: #{cross_attention_layer_forward.1} parent=15 // pred_check
          %p194 = pneg %p88
        $region26: #{cross_attention_layer_forward.1} parent=15 // pred_check_branch
          %196 = sbr.rel (%p194) target = $region28
        $region27: #{cross_attention_layer_forward.1} parent=15 // pred_region
          %s197 = sand.u32 %s78, 1
          %s198 = scalar_lea.sflag [#allocation5], %s197
          %s199 = sand.u32 %s78, 1
          %s200 = smul.addr %s199, 1024
          %s201 = scalar_lea.vmem [#allocation4], %s200
          %s203 = ssub.s32 16384, 16384
          %204 = vsyncadd %s198, %s203
          %s205 = smul.addr %s16, 256
          %s206 = smul.addr %s205, 64
          %s207 = scalar_lea.hbm %s2, %s206
          %s208 = sshll.u32 %s201, 4
          %s209 = int_to_ptr.vmem [resolvable:$true] %s208
          %214 = dma.hbm_to_vmem [thread:$0]  %s207, 16384, %s209, %s198, 128, 128, 8
        $region28: #{cross_attention_layer_forward.1} parent=15 // pred_fallthru
          _
        // Predicated region
        $region29: #{cross_attention_layer_forward.1} parent=15 // pred_check
          %p215 = pneg %p114
        $region30: #{cross_attention_layer_forward.1} parent=15 // pred_check_branch
          %217 = sbr.rel (%p215) target = $region32
        $region31: #{cross_attention_layer_forward.1} parent=15 // pred_region
          %p218 = scmp.lt.s32.totalorder %s16, 1
          %s219 = scalar_select %p218, %s16, 1
          %s220 = smul.addr %s219, 14
          %s221 = scalar_lea.vmem %s3, %s220
        $region32: #{cross_attention_layer_forward.1} parent=15 // pred_fallthru
          _
      $region16: #{cross_attention_layer_forward.1} parent=5 // pred_fallthru
        _
      %p222 = scmp.le.s32.totalorder 1, %s16
      %p223 = scmp.lt.s32.totalorder %s16, 3
      %p224 = pnand %p222, %p223
      %p225 = pneg %p224
      // Predicated region
      $region33: #{cross_attention_layer_forward.1} parent=5 // pred_check
        _
      $region34: #{cross_attention_layer_forward.1} parent=5 // pred_check_branch
        %227 = sbr.rel (%p224) target = $region36
      $region35: #{cross_attention_layer_forward.1} parent=5 // pred_region
        %s228 = ssub.s32 %s16, 1
        %s229 = sand.u32 %s55, 1
        %s230 = scalar_lea.sflag [#allocation3], %s229
        %s231 = sand.u32 %s55, 1
        %s232 = smul.addr %s231, 1024
        %s233 = scalar_lea.vmem [#allocation2], %s232
        // Predicated region
        $region37: #{cross_attention_layer_forward.1} parent=35 // pred_check
          %p234 = pneg %p68
        $region38: #{cross_attention_layer_forward.1} parent=35 // pred_check_branch
          %236 = sbr.rel (%p234) target = $region40
        $region39: #{cross_attention_layer_forward.1} parent=35 // pred_region
          %237 = dma.done %s230, 16384
        $region40: #{cross_attention_layer_forward.1} parent=35 // pred_fallthru
          _
        %s238 = sand.u32 %s81, 1
        %s239 = scalar_lea.sflag [#allocation5], %s238
        %s240 = sand.u32 %s81, 1
        %s241 = smul.addr %s240, 1024
        %s242 = scalar_lea.vmem [#allocation4], %s241
        // Predicated region
        $region41: #{cross_attention_layer_forward.1} parent=35 // pred_check
          %p243 = pneg %p94
        $region42: #{cross_attention_layer_forward.1} parent=35 // pred_check_branch
          %245 = sbr.rel (%p243) target = $region44
        $region43: #{cross_attention_layer_forward.1} parent=35 // pred_region
          %246 = dma.done %s239, 16384
        $region44: #{cross_attention_layer_forward.1} parent=35 // pred_fallthru
          _
        %p247 = scmp.lt.s32.totalorder %s21, 1
        %s248 = scalar_select %p247, %s21, 1
        %s249 = smul.addr %s248, 8
        %s250 = smul.addr %s249, 8
        %s251 = scalar_lea.vmem %s0, %s250
        %p252 = pneg %p42
        %p253 = pneg %p39
        %s254 = sand.u32 %s55, 1
        %s255 = scalar_lea.sflag [#allocation3], %s254
        %s256 = sand.u32 %s55, 1
        %s257 = smul.addr %s256, 1024
        %s258 = scalar_lea.vmem [#allocation2], %s257
        %p259 = pneg %p68
        %p260 = pneg %p65
        %s261 = sand.u32 %s81, 1
        %s262 = scalar_lea.sflag [#allocation5], %s261
        %s263 = sand.u32 %s81, 1
        %s264 = smul.addr %s263, 1024
        %s265 = scalar_lea.vmem [#allocation4], %s264
        %p266 = pneg %p94
        %p267 = pneg %p91
        %p268 = scmp.lt.s32.totalorder %s21, 1
        %s269 = scalar_select %p268, %s21, 1
        %s270 = smul.addr %s269, 14
        %s271 = scalar_lea.vmem %s3, %s270
        %p272 = pneg %p120
        %p273 = pneg %p117
        %p274 = pneg %p146
        %p275 = pneg %p143
        %p276 = scmp.lt.s32.totalorder %s21, 1
        %s277 = scalar_select %p276, %s21, 1
        %s278 = smul.addr %s277, 8
        %s279 = smul.addr %s278, 8
        %s280 = scalar_lea.vmem %s4, %s279
        %p281 = scmp.lt.s32.totalorder %s21, 1
        %s282 = scalar_select %p281, %s21, 1
        %s283 = smul.addr %s282, 8
        %s284 = smul.addr %s283, 8
        %s285 = scalar_lea.vmem %s0, %s284
        %p286 = scmp.lt.s32.totalorder %s21, 1
        %s287 = scalar_select %p286, %s21, 1
        %s288 = smul.addr %s287, 14
        %s289 = scalar_lea.vmem %s3, %s288
        %p290 = scmp.lt.s32.totalorder %s21, 1
        %s291 = scalar_select %p290, %s21, 1
        %s292 = smul.addr %s291, 8
        %s293 = smul.addr %s292, 8
        %s294 = scalar_lea.vmem %s4, %s293
        %v295 = vld [vmem:[%s285] sm:$0xff]
        %v296 = vld [vmem:[%s285 + $0x8] sm:$0xff]
        %v297 = vld [vmem:[%s285 + $0x10] sm:$0xff]
        %v298 = vld [vmem:[%s285 + $0x18] sm:$0xff]
        %v299 = vld [vmem:[%s285 + $0x20] sm:$0xff]
        %v300 = vld [vmem:[%s285 + $0x28] sm:$0xff]
        %v301 = vld [vmem:[%s285 + $0x30] sm:$0xff]
        %v302 = vld [vmem:[%s285 + $0x38] sm:$0xff]
        %v303 = vld [vmem:[%s289] sm:$0x3]
        %v304 = vld [vmem:[%s289 + $0x2] sm:$0x3]
        %v305 = vld [vmem:[%s289 + $0x4] sm:$0xff]
        %v306 = vld [vmem:[%s289 + $0xc] sm:$0x3]
        %v307 = vadd.f32 %v295, %v296
        %308 = vadd.xlane.f32.xlu0 %v307
        %v309 = vpop.xlane.xlu0 %308
        %v310 = vadd.f32 %v297, %v298
        %311 = vadd.xlane.f32.xlu0 %v310
        %v312 = vpop.xlane.xlu0 %311
        %v313 = vadd.f32 %v299, %v300
        %314 = vadd.xlane.f32.xlu0 %v313
        %v315 = vpop.xlane.xlu0 %314
        %v316 = vadd.f32 %v301, %v302
        %317 = vadd.xlane.f32.xlu0 %v316
        %v318 = vpop.xlane.xlu0 %317
        %v319 = vrcp.pop 256.0
        %v320 = vmul.f32 %v309, %v319
        %v321 = vmul.f32 %v312, %v319
        %v322 = vmul.f32 %v315, %v319
        %v323 = vmul.f32 %v318, %v319
        %v324 = vsub.f32 %v295, %v320
        %v325 = vsub.f32 %v296, %v320
        %v326 = vsub.f32 %v297, %v321
        %v327 = vsub.f32 %v298, %v321
        %v328 = vsub.f32 %v299, %v322
        %v329 = vsub.f32 %v300, %v322
        %v330 = vsub.f32 %v301, %v323
        %v331 = vsub.f32 %v302, %v323
        %v332 = vmul.f32 %v324, %v324
        %v333 = vmul.f32 %v325, %v325
        %v334 = vmul.f32 %v326, %v326
        %v335 = vmul.f32 %v327, %v327
        %v336 = vmul.f32 %v328, %v328
        %v337 = vmul.f32 %v329, %v329
        %v338 = vmul.f32 %v330, %v330
        %v339 = vmul.f32 %v331, %v331
        %v340 = vadd.f32 %v332, %v333
        %341 = vadd.xlane.f32.xlu0 %v340
        %v342 = vpop.xlane.xlu0 %341
        %v343 = vadd.f32 %v334, %v335
        %344 = vadd.xlane.f32.xlu0 %v343
        %v345 = vpop.xlane.xlu0 %344
        %v346 = vadd.f32 %v336, %v337
        %347 = vadd.xlane.f32.xlu0 %v346
        %v348 = vpop.xlane.xlu0 %347
        %v349 = vadd.f32 %v338, %v339
        %350 = vadd.xlane.f32.xlu0 %v349
        %v351 = vpop.xlane.xlu0 %350
        %v352 = vmul.f32 %v342, %v319
        %v353 = vmul.f32 %v345, %v319
        %v354 = vmul.f32 %v348, %v319
        %v355 = vmul.f32 %v351, %v319
        %v356 = vadd.f32 %v352, 1e-05
        %v357 = vadd.f32 %v353, 1e-05
        %v358 = vadd.f32 %v354, 1e-05
        %v359 = vadd.f32 %v355, 1e-05
        %v360 = vrsqrt.pop %v356
        %v361 = vrsqrt.pop %v357
        %v362 = vrsqrt.pop %v358
        %v363 = vrsqrt.pop %v359
        %v364 = vmul.f32 %v324, %v360
        %v365 = vmul.f32 %v325, %v360
        %v366 = vmul.f32 %v326, %v361
        %v367 = vmul.f32 %v327, %v361
        %v368 = vmul.f32 %v328, %v362
        %v369 = vmul.f32 %v329, %v362
        %v370 = vmul.f32 %v330, %v363
        %v371 = vmul.f32 %v331, %v363
        %v373 = vlaneseq
        %v374 = vshrl.u32 %v373, 7
        %v375 = vsub.s32 0, %v374
        %v376 = vrot.slane %v303, %v375
        %v377 = vlaneseq
        %v378 = vshrl.u32 %v377, 7
        %v379 = vsub.s32 1, %v378
        %v380 = vrot.slane %v303, %v379
        %v383 = vmul.f32 %v364, %v376
        %v384 = vmul.f32 %v365, %v380
        %v385 = vmul.f32 %v366, %v376
        %v386 = vmul.f32 %v367, %v380
        %v387 = vmul.f32 %v368, %v376
        %v388 = vmul.f32 %v369, %v380
        %v389 = vmul.f32 %v370, %v376
        %v390 = vmul.f32 %v371, %v380
        %v392 = vlaneseq
        %v393 = vshrl.u32 %v392, 7
        %v394 = vsub.s32 0, %v393
        %v395 = vrot.slane %v304, %v394
        %v396 = vlaneseq
        %v397 = vshrl.u32 %v396, 7
        %v398 = vsub.s32 1, %v397
        %v399 = vrot.slane %v304, %v398
        %v402 = vadd.f32 %v383, %v395
        %v403 = vadd.f32 %v384, %v399
        %v404 = vadd.f32 %v385, %v395
        %v405 = vadd.f32 %v386, %v399
        %v406 = vadd.f32 %v387, %v395
        %v407 = vadd.f32 %v388, %v399
        %v408 = vadd.f32 %v389, %v395
        %v409 = vadd.f32 %v390, %v399
        %v410 = vadd.f32 %v295, %v402
        %v411 = vadd.f32 %v296, %v403
        %v412 = vadd.f32 %v297, %v404
        %v413 = vadd.f32 %v298, %v405
        %v414 = vadd.f32 %v299, %v406
        %v415 = vadd.f32 %v300, %v407
        %v416 = vadd.f32 %v301, %v408
        %v417 = vadd.f32 %v302, %v409
        %v418 = vpack.c.bf16 %v412, %v410
        %v419 = vpack.c.bf16 %v413, %v411
        %v420 = vpack.c.bf16 %v416, %v414
        %v421 = vpack.c.bf16 %v417, %v415
        %v422 = vld [vmem:[%s233] sm:$0xff]
        %v423 = vld [vmem:[%s233 + $0x8] sm:$0xff]
        %v424 = vld [vmem:[%s233 + $0x10] sm:$0xff]
        %v425 = vld [vmem:[%s233 + $0x18] sm:$0xff]
        %v426 = vld [vmem:[%s233 + $0x20] sm:$0xff]
        %v427 = vld [vmem:[%s233 + $0x28] sm:$0xff]
        %v428 = vld [vmem:[%s233 + $0x30] sm:$0xff]
        %v429 = vld [vmem:[%s233 + $0x38] sm:$0xff]
        %v430 = vld [vmem:[%s233 + $0x40] sm:$0xff]
        %v431 = vld [vmem:[%s233 + $0x48] sm:$0xff]
        %v432 = vld [vmem:[%s233 + $0x50] sm:$0xff]
        %v433 = vld [vmem:[%s233 + $0x58] sm:$0xff]
        %v434 = vld [vmem:[%s233 + $0x60] sm:$0xff]
        %v435 = vld [vmem:[%s233 + $0x68] sm:$0xff]
        %v436 = vld [vmem:[%s233 + $0x70] sm:$0xff]
        %v437 = vld [vmem:[%s233 + $0x78] sm:$0xff]
        %v438 = vld [vmem:[%s233 + $0x80] sm:$0xff]
        %v439 = vld [vmem:[%s233 + $0x88] sm:$0xff]
        %v440 = vld [vmem:[%s233 + $0x90] sm:$0xff]
        %v441 = vld [vmem:[%s233 + $0x98] sm:$0xff]
        %v442 = vld [vmem:[%s233 + $0xa0] sm:$0xff]
        %v443 = vld [vmem:[%s233 + $0xa8] sm:$0xff]
        %v444 = vld [vmem:[%s233 + $0xb0] sm:$0xff]
        %v445 = vld [vmem:[%s233 + $0xb8] sm:$0xff]
        %v446 = vld [vmem:[%s233 + $0xc0] sm:$0xff]
        %v447 = vld [vmem:[%s233 + $0xc8] sm:$0xff]
        %v448 = vld [vmem:[%s233 + $0xd0] sm:$0xff]
        %v449 = vld [vmem:[%s233 + $0xd8] sm:$0xff]
        %v450 = vld [vmem:[%s233 + $0xe0] sm:$0xff]
        %v451 = vld [vmem:[%s233 + $0xe8] sm:$0xff]
        %v452 = vld [vmem:[%s233 + $0xf0] sm:$0xff]
        %v453 = vld [vmem:[%s233 + $0xf8] sm:$0xff]
        %v454 = vld [vmem:[%s233 + $0x100] sm:$0xff]
        %v455 = vld [vmem:[%s233 + $0x108] sm:$0xff]
        %v456 = vld [vmem:[%s233 + $0x110] sm:$0xff]
        %v457 = vld [vmem:[%s233 + $0x118] sm:$0xff]
        %v458 = vld [vmem:[%s233 + $0x120] sm:$0xff]
        %v459 = vld [vmem:[%s233 + $0x128] sm:$0xff]
        %v460 = vld [vmem:[%s233 + $0x130] sm:$0xff]
        %v461 = vld [vmem:[%s233 + $0x138] sm:$0xff]
        %v462 = vld [vmem:[%s233 + $0x140] sm:$0xff]
        %v463 = vld [vmem:[%s233 + $0x148] sm:$0xff]
        %v464 = vld [vmem:[%s233 + $0x150] sm:$0xff]
        %v465 = vld [vmem:[%s233 + $0x158] sm:$0xff]
        %v466 = vld [vmem:[%s233 + $0x160] sm:$0xff]
        %v467 = vld [vmem:[%s233 + $0x168] sm:$0xff]
        %v468 = vld [vmem:[%s233 + $0x170] sm:$0xff]
        %v469 = vld [vmem:[%s233 + $0x178] sm:$0xff]
        %v470 = vld [vmem:[%s233 + $0x180] sm:$0xff]
        %v471 = vld [vmem:[%s233 + $0x188] sm:$0xff]
        %v472 = vld [vmem:[%s233 + $0x190] sm:$0xff]
        %v473 = vld [vmem:[%s233 + $0x198] sm:$0xff]
        %v474 = vld [vmem:[%s233 + $0x1a0] sm:$0xff]
        %v475 = vld [vmem:[%s233 + $0x1a8] sm:$0xff]
        %v476 = vld [vmem:[%s233 + $0x1b0] sm:$0xff]
        %v477 = vld [vmem:[%s233 + $0x1b8] sm:$0xff]
        %v478 = vld [vmem:[%s233 + $0x1c0] sm:$0xff]
        %v479 = vld [vmem:[%s233 + $0x1c8] sm:$0xff]
        %v480 = vld [vmem:[%s233 + $0x1d0] sm:$0xff]
        %v481 = vld [vmem:[%s233 + $0x1d8] sm:$0xff]
        %v482 = vld [vmem:[%s233 + $0x1e0] sm:$0xff]
        %v483 = vld [vmem:[%s233 + $0x1e8] sm:$0xff]
        %v484 = vld [vmem:[%s233 + $0x1f0] sm:$0xff]
        %v485 = vld [vmem:[%s233 + $0x1f8] sm:$0xff]
        %v486 = vld [vmem:[%s233 + $0x200] sm:$0xff]
        %v487 = vld [vmem:[%s233 + $0x208] sm:$0xff]
        %v488 = vld [vmem:[%s233 + $0x210] sm:$0xff]
        %v489 = vld [vmem:[%s233 + $0x218] sm:$0xff]
        %v490 = vld [vmem:[%s233 + $0x220] sm:$0xff]
        %v491 = vld [vmem:[%s233 + $0x228] sm:$0xff]
        %v492 = vld [vmem:[%s233 + $0x230] sm:$0xff]
        %v493 = vld [vmem:[%s233 + $0x238] sm:$0xff]
        %v494 = vld [vmem:[%s233 + $0x240] sm:$0xff]
        %v495 = vld [vmem:[%s233 + $0x248] sm:$0xff]
        %v496 = vld [vmem:[%s233 + $0x250] sm:$0xff]
        %v497 = vld [vmem:[%s233 + $0x258] sm:$0xff]
        %v498 = vld [vmem:[%s233 + $0x260] sm:$0xff]
        %v499 = vld [vmem:[%s233 + $0x268] sm:$0xff]
        %v500 = vld [vmem:[%s233 + $0x270] sm:$0xff]
        %v501 = vld [vmem:[%s233 + $0x278] sm:$0xff]
        %v502 = vld [vmem:[%s233 + $0x280] sm:$0xff]
        %v503 = vld [vmem:[%s233 + $0x288] sm:$0xff]
        %v504 = vld [vmem:[%s233 + $0x290] sm:$0xff]
        %v505 = vld [vmem:[%s233 + $0x298] sm:$0xff]
        %v506 = vld [vmem:[%s233 + $0x2a0] sm:$0xff]
        %v507 = vld [vmem:[%s233 + $0x2a8] sm:$0xff]
        %v508 = vld [vmem:[%s233 + $0x2b0] sm:$0xff]
        %v509 = vld [vmem:[%s233 + $0x2b8] sm:$0xff]
        %v510 = vld [vmem:[%s233 + $0x2c0] sm:$0xff]
        %v511 = vld [vmem:[%s233 + $0x2c8] sm:$0xff]
        %v512 = vld [vmem:[%s233 + $0x2d0] sm:$0xff]
        %v513 = vld [vmem:[%s233 + $0x2d8] sm:$0xff]
        %v514 = vld [vmem:[%s233 + $0x2e0] sm:$0xff]
        %v515 = vld [vmem:[%s233 + $0x2e8] sm:$0xff]
        %v516 = vld [vmem:[%s233 + $0x2f0] sm:$0xff]
        %v517 = vld [vmem:[%s233 + $0x2f8] sm:$0xff]
        %v518 = vld [vmem:[%s233 + $0x300] sm:$0xff]
        %v519 = vld [vmem:[%s233 + $0x308] sm:$0xff]
        %v520 = vld [vmem:[%s233 + $0x310] sm:$0xff]
        %v521 = vld [vmem:[%s233 + $0x318] sm:$0xff]
        %v522 = vld [vmem:[%s233 + $0x320] sm:$0xff]
        %v523 = vld [vmem:[%s233 + $0x328] sm:$0xff]
        %v524 = vld [vmem:[%s233 + $0x330] sm:$0xff]
        %v525 = vld [vmem:[%s233 + $0x338] sm:$0xff]
        %v526 = vld [vmem:[%s233 + $0x340] sm:$0xff]
        %v527 = vld [vmem:[%s233 + $0x348] sm:$0xff]
        %v528 = vld [vmem:[%s233 + $0x350] sm:$0xff]
        %v529 = vld [vmem:[%s233 + $0x358] sm:$0xff]
        %v530 = vld [vmem:[%s233 + $0x360] sm:$0xff]
        %v531 = vld [vmem:[%s233 + $0x368] sm:$0xff]
        %v532 = vld [vmem:[%s233 + $0x370] sm:$0xff]
        %v533 = vld [vmem:[%s233 + $0x378] sm:$0xff]
        %v534 = vld [vmem:[%s233 + $0x380] sm:$0xff]
        %v535 = vld [vmem:[%s233 + $0x388] sm:$0xff]
        %v536 = vld [vmem:[%s233 + $0x390] sm:$0xff]
        %v537 = vld [vmem:[%s233 + $0x398] sm:$0xff]
        %v538 = vld [vmem:[%s233 + $0x3a0] sm:$0xff]
        %v539 = vld [vmem:[%s233 + $0x3a8] sm:$0xff]
        %v540 = vld [vmem:[%s233 + $0x3b0] sm:$0xff]
        %v541 = vld [vmem:[%s233 + $0x3b8] sm:$0xff]
        %v542 = vld [vmem:[%s233 + $0x3c0] sm:$0xff]
        %v543 = vld [vmem:[%s233 + $0x3c8] sm:$0xff]
        %v544 = vld [vmem:[%s233 + $0x3d0] sm:$0xff]
        %v545 = vld [vmem:[%s233 + $0x3d8] sm:$0xff]
        %v546 = vld [vmem:[%s233 + $0x3e0] sm:$0xff]
        %v547 = vld [vmem:[%s233 + $0x3e8] sm:$0xff]
        %v548 = vld [vmem:[%s233 + $0x3f0] sm:$0xff]
        %v549 = vld [vmem:[%s233 + $0x3f8] sm:$0xff]
        %v551 = vlaneseq
        %v552 = vshrl.u32 %v551, 7
        %v553 = vsub.s32 0, %v552
        %v554 = vrot.slane %v305, %v553
        %v555 = vlaneseq
        %v556 = vshrl.u32 %v555, 7
        %v557 = vsub.s32 1, %v556
        %v558 = vrot.slane %v305, %v557
        %v559 = vlaneseq
        %v560 = vshrl.u32 %v559, 7
        %v561 = vsub.s32 2, %v560
        %v562 = vrot.slane %v305, %v561
        %v563 = vlaneseq
        %v564 = vshrl.u32 %v563, 7
        %v565 = vsub.s32 3, %v564
        %v566 = vrot.slane %v305, %v565
        %v567 = vlaneseq
        %v568 = vshrl.u32 %v567, 7
        %v569 = vsub.s32 4, %v568
        %v570 = vrot.slane %v305, %v569
        %v571 = vlaneseq
        %v572 = vshrl.u32 %v571, 7
        %v573 = vsub.s32 5, %v572
        %v574 = vrot.slane %v305, %v573
        %v575 = vlaneseq
        %v576 = vshrl.u32 %v575, 7
        %v577 = vsub.s32 6, %v576
        %v578 = vrot.slane %v305, %v577
        %v579 = vlaneseq
        %v580 = vshrl.u32 %v579, 7
        %v581 = vsub.s32 7, %v580
        %v582 = vrot.slane %v305, %v581
        %v719 = vunpack.c.l.b16 %v422
        %v720 = vunpack.c.h.b16 %v422
        %v721 = vunpack.c.l.b16 %v423
        %v722 = vunpack.c.h.b16 %v423
        %v723 = vunpack.c.l.b16 %v424
        %v724 = vunpack.c.h.b16 %v424
        %v725 = vunpack.c.l.b16 %v425
        %v726 = vunpack.c.h.b16 %v425
        %v727 = vunpack.c.l.b16 %v426
        %v728 = vunpack.c.h.b16 %v426
        %v729 = vunpack.c.l.b16 %v427
        %v730 = vunpack.c.h.b16 %v427
        %v731 = vunpack.c.l.b16 %v428
        %v732 = vunpack.c.h.b16 %v428
        %v733 = vunpack.c.l.b16 %v429
        %v734 = vunpack.c.h.b16 %v429
        %v735 = vunpack.c.l.b16 %v430
        %v736 = vunpack.c.h.b16 %v430
        %v737 = vunpack.c.l.b16 %v431
        %v738 = vunpack.c.h.b16 %v431
        %v739 = vunpack.c.l.b16 %v432
        %v740 = vunpack.c.h.b16 %v432
        %v741 = vunpack.c.l.b16 %v433
        %v742 = vunpack.c.h.b16 %v433
        %v743 = vunpack.c.l.b16 %v434
        %v744 = vunpack.c.h.b16 %v434
        %v745 = vunpack.c.l.b16 %v435
        %v746 = vunpack.c.h.b16 %v435
        %v747 = vunpack.c.l.b16 %v436
        %v748 = vunpack.c.h.b16 %v436
        %v749 = vunpack.c.l.b16 %v437
        %v750 = vunpack.c.h.b16 %v437
        %v751 = vunpack.c.l.b16 %v438
        %v752 = vunpack.c.h.b16 %v438
        %v753 = vunpack.c.l.b16 %v439
        %v754 = vunpack.c.h.b16 %v439
        %v755 = vunpack.c.l.b16 %v440
        %v756 = vunpack.c.h.b16 %v440
        %v757 = vunpack.c.l.b16 %v441
        %v758 = vunpack.c.h.b16 %v441
        %v759 = vunpack.c.l.b16 %v442
        %v760 = vunpack.c.h.b16 %v442
        %v761 = vunpack.c.l.b16 %v443
        %v762 = vunpack.c.h.b16 %v443
        %v763 = vunpack.c.l.b16 %v444
        %v764 = vunpack.c.h.b16 %v444
        %v765 = vunpack.c.l.b16 %v445
        %v766 = vunpack.c.h.b16 %v445
        %v767 = vunpack.c.l.b16 %v446
        %v768 = vunpack.c.h.b16 %v446
        %v769 = vunpack.c.l.b16 %v447
        %v770 = vunpack.c.h.b16 %v447
        %v771 = vunpack.c.l.b16 %v448
        %v772 = vunpack.c.h.b16 %v448
        %v773 = vunpack.c.l.b16 %v449
        %v774 = vunpack.c.h.b16 %v449
        %v775 = vunpack.c.l.b16 %v450
        %v776 = vunpack.c.h.b16 %v450
        %v777 = vunpack.c.l.b16 %v451
        %v778 = vunpack.c.h.b16 %v451
        %v779 = vunpack.c.l.b16 %v452
        %v780 = vunpack.c.h.b16 %v452
        %v781 = vunpack.c.l.b16 %v453
        %v782 = vunpack.c.h.b16 %v453
        %v783 = vunpack.c.l.b16 %v454
        %v784 = vunpack.c.h.b16 %v454
        %v785 = vunpack.c.l.b16 %v455
        %v786 = vunpack.c.h.b16 %v455
        %v787 = vunpack.c.l.b16 %v456
        %v788 = vunpack.c.h.b16 %v456
        %v789 = vunpack.c.l.b16 %v457
        %v790 = vunpack.c.h.b16 %v457
        %v791 = vunpack.c.l.b16 %v458
        %v792 = vunpack.c.h.b16 %v458
        %v793 = vunpack.c.l.b16 %v459
        %v794 = vunpack.c.h.b16 %v459
        %v795 = vunpack.c.l.b16 %v460
        %v796 = vunpack.c.h.b16 %v460
        %v797 = vunpack.c.l.b16 %v461
        %v798 = vunpack.c.h.b16 %v461
        %v799 = vunpack.c.l.b16 %v462
        %v800 = vunpack.c.h.b16 %v462
        %v801 = vunpack.c.l.b16 %v463
        %v802 = vunpack.c.h.b16 %v463
        %v803 = vunpack.c.l.b16 %v464
        %v804 = vunpack.c.h.b16 %v464
        %v805 = vunpack.c.l.b16 %v465
        %v806 = vunpack.c.h.b16 %v465
        %v807 = vunpack.c.l.b16 %v466
        %v808 = vunpack.c.h.b16 %v466
        %v809 = vunpack.c.l.b16 %v467
        %v810 = vunpack.c.h.b16 %v467
        %v811 = vunpack.c.l.b16 %v468
        %v812 = vunpack.c.h.b16 %v468
        %v813 = vunpack.c.l.b16 %v469
        %v814 = vunpack.c.h.b16 %v469
        %v815 = vunpack.c.l.b16 %v470
        %v816 = vunpack.c.h.b16 %v470
        %v817 = vunpack.c.l.b16 %v471
        %v818 = vunpack.c.h.b16 %v471
        %v819 = vunpack.c.l.b16 %v472
        %v820 = vunpack.c.h.b16 %v472
        %v821 = vunpack.c.l.b16 %v473
        %v822 = vunpack.c.h.b16 %v473
        %v823 = vunpack.c.l.b16 %v474
        %v824 = vunpack.c.h.b16 %v474
        %v825 = vunpack.c.l.b16 %v475
        %v826 = vunpack.c.h.b16 %v475
        %v827 = vunpack.c.l.b16 %v476
        %v828 = vunpack.c.h.b16 %v476
        %v829 = vunpack.c.l.b16 %v477
        %v830 = vunpack.c.h.b16 %v477
        %v831 = vunpack.c.l.b16 %v478
        %v832 = vunpack.c.h.b16 %v478
        %v833 = vunpack.c.l.b16 %v479
        %v834 = vunpack.c.h.b16 %v479
        %v835 = vunpack.c.l.b16 %v480
        %v836 = vunpack.c.h.b16 %v480
        %v837 = vunpack.c.l.b16 %v481
        %v838 = vunpack.c.h.b16 %v481
        %v839 = vunpack.c.l.b16 %v482
        %v840 = vunpack.c.h.b16 %v482
        %v841 = vunpack.c.l.b16 %v483
        %v842 = vunpack.c.h.b16 %v483
        %v843 = vunpack.c.l.b16 %v484
        %v844 = vunpack.c.h.b16 %v484
        %v845 = vunpack.c.l.b16 %v485
        %v846 = vunpack.c.h.b16 %v485
        %v847 = vunpack.c.l.b16 %v486
        %v848 = vunpack.c.h.b16 %v486
        %v849 = vunpack.c.l.b16 %v487
        %v850 = vunpack.c.h.b16 %v487
        %v851 = vunpack.c.l.b16 %v488
        %v852 = vunpack.c.h.b16 %v488
        %v853 = vunpack.c.l.b16 %v489
        %v854 = vunpack.c.h.b16 %v489
        %v855 = vunpack.c.l.b16 %v490
        %v856 = vunpack.c.h.b16 %v490
        %v857 = vunpack.c.l.b16 %v491
        %v858 = vunpack.c.h.b16 %v491
        %v859 = vunpack.c.l.b16 %v492
        %v860 = vunpack.c.h.b16 %v492
        %v861 = vunpack.c.l.b16 %v493
        %v862 = vunpack.c.h.b16 %v493
        %v863 = vunpack.c.l.b16 %v494
        %v864 = vunpack.c.h.b16 %v494
        %v865 = vunpack.c.l.b16 %v495
        %v866 = vunpack.c.h.b16 %v495
        %v867 = vunpack.c.l.b16 %v496
        %v868 = vunpack.c.h.b16 %v496
        %v869 = vunpack.c.l.b16 %v497
        %v870 = vunpack.c.h.b16 %v497
        %v871 = vunpack.c.l.b16 %v498
        %v872 = vunpack.c.h.b16 %v498
        %v873 = vunpack.c.l.b16 %v499
        %v874 = vunpack.c.h.b16 %v499
        %v875 = vunpack.c.l.b16 %v500
        %v876 = vunpack.c.h.b16 %v500
        %v877 = vunpack.c.l.b16 %v501
        %v878 = vunpack.c.h.b16 %v501
        %v879 = vunpack.c.l.b16 %v502
        %v880 = vunpack.c.h.b16 %v502
        %v881 = vunpack.c.l.b16 %v503
        %v882 = vunpack.c.h.b16 %v503
        %v883 = vunpack.c.l.b16 %v504
        %v884 = vunpack.c.h.b16 %v504
        %v885 = vunpack.c.l.b16 %v505
        %v886 = vunpack.c.h.b16 %v505
        %v887 = vunpack.c.l.b16 %v506
        %v888 = vunpack.c.h.b16 %v506
        %v889 = vunpack.c.l.b16 %v507
        %v890 = vunpack.c.h.b16 %v507
        %v891 = vunpack.c.l.b16 %v508
        %v892 = vunpack.c.h.b16 %v508
        %v893 = vunpack.c.l.b16 %v509
        %v894 = vunpack.c.h.b16 %v509
        %v895 = vunpack.c.l.b16 %v510
        %v896 = vunpack.c.h.b16 %v510
        %v897 = vunpack.c.l.b16 %v511
        %v898 = vunpack.c.h.b16 %v511
        %v899 = vunpack.c.l.b16 %v512
        %v900 = vunpack.c.h.b16 %v512
        %v901 = vunpack.c.l.b16 %v513
        %v902 = vunpack.c.h.b16 %v513
        %v903 = vunpack.c.l.b16 %v514
        %v904 = vunpack.c.h.b16 %v514
        %v905 = vunpack.c.l.b16 %v515
        %v906 = vunpack.c.h.b16 %v515
        %v907 = vunpack.c.l.b16 %v516
        %v908 = vunpack.c.h.b16 %v516
        %v909 = vunpack.c.l.b16 %v517
        %v910 = vunpack.c.h.b16 %v517
        %v911 = vunpack.c.l.b16 %v518
        %v912 = vunpack.c.h.b16 %v518
        %v913 = vunpack.c.l.b16 %v519
        %v914 = vunpack.c.h.b16 %v519
        %v915 = vunpack.c.l.b16 %v520
        %v916 = vunpack.c.h.b16 %v520
        %v917 = vunpack.c.l.b16 %v521
        %v918 = vunpack.c.h.b16 %v521
        %v919 = vunpack.c.l.b16 %v522
        %v920 = vunpack.c.h.b16 %v522
        %v921 = vunpack.c.l.b16 %v523
        %v922 = vunpack.c.h.b16 %v523
        %v923 = vunpack.c.l.b16 %v524
        %v924 = vunpack.c.h.b16 %v524
        %v925 = vunpack.c.l.b16 %v525
        %v926 = vunpack.c.h.b16 %v525
        %v927 = vunpack.c.l.b16 %v526
        %v928 = vunpack.c.h.b16 %v526
        %v929 = vunpack.c.l.b16 %v527
        %v930 = vunpack.c.h.b16 %v527
        %v931 = vunpack.c.l.b16 %v528
        %v932 = vunpack.c.h.b16 %v528
        %v933 = vunpack.c.l.b16 %v529
        %v934 = vunpack.c.h.b16 %v529
        %v935 = vunpack.c.l.b16 %v530
        %v936 = vunpack.c.h.b16 %v530
        %v937 = vunpack.c.l.b16 %v531
        %v938 = vunpack.c.h.b16 %v531
        %v939 = vunpack.c.l.b16 %v532
        %v940 = vunpack.c.h.b16 %v532
        %v941 = vunpack.c.l.b16 %v533
        %v942 = vunpack.c.h.b16 %v533
        %v943 = vunpack.c.l.b16 %v534
        %v944 = vunpack.c.h.b16 %v534
        %v945 = vunpack.c.l.b16 %v535
        %v946 = vunpack.c.h.b16 %v535
        %v947 = vunpack.c.l.b16 %v536
        %v948 = vunpack.c.h.b16 %v536
        %v949 = vunpack.c.l.b16 %v537
        %v950 = vunpack.c.h.b16 %v537
        %v951 = vunpack.c.l.b16 %v538
        %v952 = vunpack.c.h.b16 %v538
        %v953 = vunpack.c.l.b16 %v539
        %v954 = vunpack.c.h.b16 %v539
        %v955 = vunpack.c.l.b16 %v540
        %v956 = vunpack.c.h.b16 %v540
        %v957 = vunpack.c.l.b16 %v541
        %v958 = vunpack.c.h.b16 %v541
        %v959 = vunpack.c.l.b16 %v542
        %v960 = vunpack.c.h.b16 %v542
        %v961 = vunpack.c.l.b16 %v543
        %v962 = vunpack.c.h.b16 %v543
        %v963 = vunpack.c.l.b16 %v544
        %v964 = vunpack.c.h.b16 %v544
        %v965 = vunpack.c.l.b16 %v545
        %v966 = vunpack.c.h.b16 %v545
        %v967 = vunpack.c.l.b16 %v546
        %v968 = vunpack.c.h.b16 %v546
        %v969 = vunpack.c.l.b16 %v547
        %v970 = vunpack.c.h.b16 %v547
        %v971 = vunpack.c.l.b16 %v548
        %v972 = vunpack.c.h.b16 %v548
        %v973 = vunpack.c.l.b16 %v549
        %v974 = vunpack.c.h.b16 %v549
        %v975 = vpack.c.b16 %v727, %v719
        %v976 = vpack.c.b16 %v728, %v720
        %v977 = vpack.c.b16 %v729, %v721
        %v978 = vpack.c.b16 %v730, %v722
        %v979 = vpack.c.b16 %v731, %v723
        %v980 = vpack.c.b16 %v732, %v724
        %v981 = vpack.c.b16 %v733, %v725
        %v982 = vpack.c.b16 %v734, %v726
        %v983 = vpack.c.b16 %v743, %v735
        %v984 = vpack.c.b16 %v744, %v736
        %v985 = vpack.c.b16 %v745, %v737
        %v986 = vpack.c.b16 %v746, %v738
        %v987 = vpack.c.b16 %v747, %v739
        %v988 = vpack.c.b16 %v748, %v740
        %v989 = vpack.c.b16 %v749, %v741
        %v990 = vpack.c.b16 %v750, %v742
        %v991 = vpack.c.b16 %v759, %v751
        %v992 = vpack.c.b16 %v760, %v752
        %v993 = vpack.c.b16 %v761, %v753
        %v994 = vpack.c.b16 %v762, %v754
        %v995 = vpack.c.b16 %v763, %v755
        %v996 = vpack.c.b16 %v764, %v756
        %v997 = vpack.c.b16 %v765, %v757
        %v998 = vpack.c.b16 %v766, %v758
        %v999 = vpack.c.b16 %v775, %v767
        %v1000 = vpack.c.b16 %v776, %v768
        %v1001 = vpack.c.b16 %v777, %v769
        %v1002 = vpack.c.b16 %v778, %v770
        %v1003 = vpack.c.b16 %v779, %v771
        %v1004 = vpack.c.b16 %v780, %v772
        %v1005 = vpack.c.b16 %v781, %v773
        %v1006 = vpack.c.b16 %v782, %v774
        %v1007 = vpack.c.b16 %v791, %v783
        %v1008 = vpack.c.b16 %v792, %v784
        %v1009 = vpack.c.b16 %v793, %v785
        %v1010 = vpack.c.b16 %v794, %v786
        %v1011 = vpack.c.b16 %v795, %v787
        %v1012 = vpack.c.b16 %v796, %v788
        %v1013 = vpack.c.b16 %v797, %v789
        %v1014 = vpack.c.b16 %v798, %v790
        %v1015 = vpack.c.b16 %v807, %v799
        %v1016 = vpack.c.b16 %v808, %v800
        %v1017 = vpack.c.b16 %v809, %v801
        %v1018 = vpack.c.b16 %v810, %v802
        %v1019 = vpack.c.b16 %v811, %v803
        %v1020 = vpack.c.b16 %v812, %v804
        %v1021 = vpack.c.b16 %v813, %v805
        %v1022 = vpack.c.b16 %v814, %v806
        %v1023 = vpack.c.b16 %v823, %v815
        %v1024 = vpack.c.b16 %v824, %v816
        %v1025 = vpack.c.b16 %v825, %v817
        %v1026 = vpack.c.b16 %v826, %v818
        %v1027 = vpack.c.b16 %v827, %v819
        %v1028 = vpack.c.b16 %v828, %v820
        %v1029 = vpack.c.b16 %v829, %v821
        %v1030 = vpack.c.b16 %v830, %v822
        %v1031 = vpack.c.b16 %v839, %v831
        %v1032 = vpack.c.b16 %v840, %v832
        %v1033 = vpack.c.b16 %v841, %v833
        %v1034 = vpack.c.b16 %v842, %v834
        %v1035 = vpack.c.b16 %v843, %v835
        %v1036 = vpack.c.b16 %v844, %v836
        %v1037 = vpack.c.b16 %v845, %v837
        %v1038 = vpack.c.b16 %v846, %v838
        %v1039 = vpack.c.b16 %v855, %v847
        %v1040 = vpack.c.b16 %v856, %v848
        %v1041 = vpack.c.b16 %v857, %v849
        %v1042 = vpack.c.b16 %v858, %v850
        %v1043 = vpack.c.b16 %v859, %v851
        %v1044 = vpack.c.b16 %v860, %v852
        %v1045 = vpack.c.b16 %v861, %v853
        %v1046 = vpack.c.b16 %v862, %v854
        %v1047 = vpack.c.b16 %v871, %v863
        %v1048 = vpack.c.b16 %v872, %v864
        %v1049 = vpack.c.b16 %v873, %v865
        %v1050 = vpack.c.b16 %v874, %v866
        %v1051 = vpack.c.b16 %v875, %v867
        %v1052 = vpack.c.b16 %v876, %v868
        %v1053 = vpack.c.b16 %v877, %v869
        %v1054 = vpack.c.b16 %v878, %v870
        %v1055 = vpack.c.b16 %v887, %v879
        %v1056 = vpack.c.b16 %v888, %v880
        %v1057 = vpack.c.b16 %v889, %v881
        %v1058 = vpack.c.b16 %v890, %v882
        %v1059 = vpack.c.b16 %v891, %v883
        %v1060 = vpack.c.b16 %v892, %v884
        %v1061 = vpack.c.b16 %v893, %v885
        %v1062 = vpack.c.b16 %v894, %v886
        %v1063 = vpack.c.b16 %v903, %v895
        %v1064 = vpack.c.b16 %v904, %v896
        %v1065 = vpack.c.b16 %v905, %v897
        %v1066 = vpack.c.b16 %v906, %v898
        %v1067 = vpack.c.b16 %v907, %v899
        %v1068 = vpack.c.b16 %v908, %v900
        %v1069 = vpack.c.b16 %v909, %v901
        %v1070 = vpack.c.b16 %v910, %v902
        %v1071 = vpack.c.b16 %v919, %v911
        %v1072 = vpack.c.b16 %v920, %v912
        %v1073 = vpack.c.b16 %v921, %v913
        %v1074 = vpack.c.b16 %v922, %v914
        %v1075 = vpack.c.b16 %v923, %v915
        %v1076 = vpack.c.b16 %v924, %v916
        %v1077 = vpack.c.b16 %v925, %v917
        %v1078 = vpack.c.b16 %v926, %v918
        %v1079 = vpack.c.b16 %v935, %v927
        %v1080 = vpack.c.b16 %v936, %v928
        %v1081 = vpack.c.b16 %v937, %v929
        %v1082 = vpack.c.b16 %v938, %v930
        %v1083 = vpack.c.b16 %v939, %v931
        %v1084 = vpack.c.b16 %v940, %v932
        %v1085 = vpack.c.b16 %v941, %v933
        %v1086 = vpack.c.b16 %v942, %v934
        %v1087 = vpack.c.b16 %v951, %v943
        %v1088 = vpack.c.b16 %v952, %v944
        %v1089 = vpack.c.b16 %v953, %v945
        %v1090 = vpack.c.b16 %v954, %v946
        %v1091 = vpack.c.b16 %v955, %v947
        %v1092 = vpack.c.b16 %v956, %v948
        %v1093 = vpack.c.b16 %v957, %v949
        %v1094 = vpack.c.b16 %v958, %v950
        %v1095 = vpack.c.b16 %v967, %v959
        %v1096 = vpack.c.b16 %v968, %v960
        %v1097 = vpack.c.b16 %v969, %v961
        %v1098 = vpack.c.b16 %v970, %v962
        %v1099 = vpack.c.b16 %v971, %v963
        %v1100 = vpack.c.b16 %v972, %v964
        %v1101 = vpack.c.b16 %v973, %v965
        %v1102 = vpack.c.b16 %v974, %v966
        %1231 = vmatprep.subr.bf16.mxu0 %v976
        %1232 = vmatpush1.bf16.msra.mxu0 %v975
        %1233 = vmatprep.subr.bf16.mxu0 %v984
        %1234 = vmatpush1.bf16.msra.mxu0 %v983
        %1235 = vmatprep.subr.bf16.mxu0 %v992
        %1236 = vmatpush1.bf16.msra.mxu0 %v991
        %1237 = vmatprep.subr.bf16.mxu0 %v1000
        %1238 = vmatpush1.bf16.msra.mxu0 %v999
        %1239 = vmatprep.subr.bf16.mxu0 %v1008
        %1240 = vmatpush1.bf16.msra.mxu0 %v1007
        %1241 = vmatprep.subr.bf16.mxu0 %v1016
        %1242 = vmatpush1.bf16.msra.mxu0 %v1015
        %1243 = vmatprep.subr.bf16.mxu0 %v1024
        %1244 = vmatpush1.bf16.msra.mxu0 %v1023
        %1245 = vmatprep.subr.bf16.mxu0 %v1032
        %1246 = vmatpush1.bf16.msra.mxu0 %v1031
        %1247 = vmatprep.subr.bf16.mxu0 %v1040
        %1248 = vmatpush1.bf16.msra.mxu0 %v1039
        %1249 = vmatprep.subr.bf16.mxu0 %v1048
        %1250 = vmatpush1.bf16.msra.mxu0 %v1047
        %1251 = vmatprep.subr.bf16.mxu0 %v1056
        %1252 = vmatpush1.bf16.msra.mxu0 %v1055
        %1253 = vmatprep.subr.bf16.mxu0 %v1064
        %1254 = vmatpush1.bf16.msra.mxu0 %v1063
        %1255 = vmatprep.subr.bf16.mxu0 %v1072
        %1256 = vmatpush1.bf16.msra.mxu0 %v1071
        %1257 = vmatprep.subr.bf16.mxu0 %v1080
        %1258 = vmatpush1.bf16.msra.mxu0 %v1079
        %1259 = vmatprep.subr.bf16.mxu0 %v1088
        %1260 = vmatpush1.bf16.msra.mxu0 %v1087
        %1261 = vmatprep.subr.bf16.mxu0 %v1096
        %1262 = vmatpush1.bf16.msra.mxu0 %v1095
        %1263 = vmatprep.mubr.bf16.mxu0 %v419
        %1264 = vmatmul.mubr.bf16.gmra.mrb[0].mxu0 %v418
        %v1265 = vpop.f32.mrb[0].mxu0
        %v1266 = vadd.f32 %v554, %v1265
        %v1267 = vpop.f32.mrb[0].mxu0
        %v1268 = vadd.f32 %v558, %v1267
        %v1269 = vpop.f32.mrb[0].mxu0
        %v1270 = vadd.f32 %v554, %v1269
        %v1271 = vpop.f32.mrb[0].mxu0
        %v1272 = vadd.f32 %v558, %v1271
        %1273 = vmatprep.mubr.bf16.mxu0 %v421
        %1274 = vmatmul.mubr.bf16.gmra.mrb[0].mxu0 %v420
        %v1275 = vpop.f32.mrb[0].mxu0
        %v1276 = vadd.f32 %v554, %v1275
        %v1277 = vpop.f32.mrb[0].mxu0
        %v1278 = vadd.f32 %v558, %v1277
        %v1279 = vpop.f32.mrb[0].mxu0
        %v1280 = vadd.f32 %v554, %v1279
        %v1281 = vpop.f32.mrb[0].mxu0
        %v1282 = vadd.f32 %v558, %v1281
        %1283 = vdwg.mxu0
        %1284 = vmatprep.subr.bf16.mxu0 %v978
        %1285 = vmatpush1.bf16.msra.mxu0 %v977
        %1286 = vmatprep.subr.bf16.mxu0 %v986
        %1287 = vmatpush1.bf16.msra.mxu0 %v985
        %1288 = vmatprep.subr.bf16.mxu0 %v994
        %1289 = vmatpush1.bf16.msra.mxu0 %v993
        %1290 = vmatprep.subr.bf16.mxu0 %v1002
        %1291 = vmatpush1.bf16.msra.mxu0 %v1001
        %1292 = vmatprep.subr.bf16.mxu0 %v1010
        %1293 = vmatpush1.bf16.msra.mxu0 %v1009
        %1294 = vmatprep.subr.bf16.mxu0 %v1018
        %1295 = vmatpush1.bf16.msra.mxu0 %v1017
        %1296 = vmatprep.subr.bf16.mxu0 %v1026
        %1297 = vmatpush1.bf16.msra.mxu0 %v1025
        %1298 = vmatprep.subr.bf16.mxu0 %v1034
        %1299 = vmatpush1.bf16.msra.mxu0 %v1033
        %1300 = vmatprep.subr.bf16.mxu0 %v1042
        %1301 = vmatpush1.bf16.msra.mxu0 %v1041
        %1302 = vmatprep.subr.bf16.mxu0 %v1050
        %1303 = vmatpush1.bf16.msra.mxu0 %v1049
        %1304 = vmatprep.subr.bf16.mxu0 %v1058
        %1305 = vmatpush1.bf16.msra.mxu0 %v1057
        %1306 = vmatprep.subr.bf16.mxu0 %v1066
        %1307 = vmatpush1.bf16.msra.mxu0 %v1065
        %1308 = vmatprep.subr.bf16.mxu0 %v1074
        %1309 = vmatpush1.bf16.msra.mxu0 %v1073
        %1310 = vmatprep.subr.bf16.mxu0 %v1082
        %1311 = vmatpush1.bf16.msra.mxu0 %v1081
        %1312 = vmatprep.subr.bf16.mxu0 %v1090
        %1313 = vmatpush1.bf16.msra.mxu0 %v1089
        %1314 = vmatprep.subr.bf16.mxu0 %v1098
        %1315 = vmatpush1.bf16.msra.mxu0 %v1097
        %1316 = vmatprep.mubr.bf16.mxu0 %v419
        %1317 = vmatmul.mubr.bf16.gmra.mrb[0].mxu0 %v418
        %v1318 = vpop.f32.mrb[0].mxu0
        %v1319 = vadd.f32 %v562, %v1318
        %v1320 = vpop.f32.mrb[0].mxu0
        %v1321 = vadd.f32 %v566, %v1320
        %v1322 = vpop.f32.mrb[0].mxu0
        %v1323 = vadd.f32 %v562, %v1322
        %v1324 = vpop.f32.mrb[0].mxu0
        %v1325 = vadd.f32 %v566, %v1324
        %1326 = vmatprep.mubr.bf16.mxu0 %v421
        %1327 = vmatmul.mubr.bf16.gmra.mrb[0].mxu0 %v420
        %v1328 = vpop.f32.mrb[0].mxu0
        %v1329 = vadd.f32 %v562, %v1328
        %v1330 = vpop.f32.mrb[0].mxu0
        %v1331 = vadd.f32 %v566, %v1330
        %v1332 = vpop.f32.mrb[0].mxu0
        %v1333 = vadd.f32 %v562, %v1332
        %v1334 = vpop.f32.mrb[0].mxu0
        %v1335 = vadd.f32 %v566, %v1334
        %1336 = vdwg.mxu0
        %1337 = vmatprep.subr.bf16.mxu0 %v980
        %1338 = vmatpush1.bf16.msra.mxu0 %v979
        %1339 = vmatprep.subr.bf16.mxu0 %v988
        %1340 = vmatpush1.bf16.msra.mxu0 %v987
        %1341 = vmatprep.subr.bf16.mxu0 %v996
        %1342 = vmatpush1.bf16.msra.mxu0 %v995
        %1343 = vmatprep.subr.bf16.mxu0 %v1004
        %1344 = vmatpush1.bf16.msra.mxu0 %v1003
        %1345 = vmatprep.subr.bf16.mxu0 %v1012
        %1346 = vmatpush1.bf16.msra.mxu0 %v1011
        %1347 = vmatprep.subr.bf16.mxu0 %v1020
        %1348 = vmatpush1.bf16.msra.mxu0 %v1019
        %1349 = vmatprep.subr.bf16.mxu0 %v1028
        %1350 = vmatpush1.bf16.msra.mxu0 %v1027
        %1351 = vmatprep.subr.bf16.mxu0 %v1036
        %1352 = vmatpush1.bf16.msra.mxu0 %v1035
        %1353 = vmatprep.subr.bf16.mxu0 %v1044
        %1354 = vmatpush1.bf16.msra.mxu0 %v1043
        %1355 = vmatprep.subr.bf16.mxu0 %v1052
        %1356 = vmatpush1.bf16.msra.mxu0 %v1051
        %1357 = vmatprep.subr.bf16.mxu0 %v1060
        %1358 = vmatpush1.bf16.msra.mxu0 %v1059
        %1359 = vmatprep.subr.bf16.mxu0 %v1068
        %1360 = vmatpush1.bf16.msra.mxu0 %v1067
        %1361 = vmatprep.subr.bf16.mxu0 %v1076
        %1362 = vmatpush1.bf16.msra.mxu0 %v1075
        %1363 = vmatprep.subr.bf16.mxu0 %v1084
        %1364 = vmatpush1.bf16.msra.mxu0 %v1083
        %1365 = vmatprep.subr.bf16.mxu0 %v1092
        %1366 = vmatpush1.bf16.msra.mxu0 %v1091
        %1367 = vmatprep.subr.bf16.mxu0 %v1100
        %1368 = vmatpush1.bf16.msra.mxu0 %v1099
        %1369 = vmatprep.mubr.bf16.mxu0 %v419
        %1370 = vmatmul.mubr.bf16.gmra.mrb[0].mxu0 %v418
        %v1371 = vpop.f32.mrb[0].mxu0
        %v1372 = vadd.f32 %v570, %v1371
        %v1373 = vpop.f32.mrb[0].mxu0
        %v1374 = vadd.f32 %v574, %v1373
        %v1375 = vpop.f32.mrb[0].mxu0
        %v1376 = vadd.f32 %v570, %v1375
        %v1377 = vpop.f32.mrb[0].mxu0
        %v1378 = vadd.f32 %v574, %v1377
        %1379 = vmatprep.mubr.bf16.mxu0 %v421
        %1380 = vmatmul.mubr.bf16.gmra.mrb[0].mxu0 %v420
        %v1381 = vpop.f32.mrb[0].mxu0
        %v1382 = vadd.f32 %v570, %v1381
        %v1383 = vpop.f32.mrb[0].mxu0
        %v1384 = vadd.f32 %v574, %v1383
        %v1385 = vpop.f32.mrb[0].mxu0
        %v1386 = vadd.f32 %v570, %v1385
        %v1387 = vpop.f32.mrb[0].mxu0
        %v1388 = vadd.f32 %v574, %v1387
        %1389 = vdwg.mxu0
        %1390 = vmatprep.subr.bf16.mxu0 %v982
        %1391 = vmatpush1.bf16.msra.mxu0 %v981
        %1392 = vmatprep.subr.bf16.mxu0 %v990
        %1393 = vmatpush1.bf16.msra.mxu0 %v989
        %1394 = vmatprep.subr.bf16.mxu0 %v998
        %1395 = vmatpush1.bf16.msra.mxu0 %v997
        %1396 = vmatprep.subr.bf16.mxu0 %v1006
        %1397 = vmatpush1.bf16.msra.mxu0 %v1005
        %1398 = vmatprep.subr.bf16.mxu0 %v1014
        %1399 = vmatpush1.bf16.msra.mxu0 %v1013
        %1400 = vmatprep.subr.bf16.mxu0 %v1022
        %1401 = vmatpush1.bf16.msra.mxu0 %v1021
        %1402 = vmatprep.subr.bf16.mxu0 %v1030
        %1403 = vmatpush1.bf16.msra.mxu0 %v1029
        %1404 = vmatprep.subr.bf16.mxu0 %v1038
        %1405 = vmatpush1.bf16.msra.mxu0 %v1037
        %1406 = vmatprep.subr.bf16.mxu0 %v1046
        %1407 = vmatpush1.bf16.msra.mxu0 %v1045
        %1408 = vmatprep.subr.bf16.mxu0 %v1054
        %1409 = vmatpush1.bf16.msra.mxu0 %v1053
        %1410 = vmatprep.subr.bf16.mxu0 %v1062
        %1411 = vmatpush1.bf16.msra.mxu0 %v1061
        %1412 = vmatprep.subr.bf16.mxu0 %v1070
        %1413 = vmatpush1.bf16.msra.mxu0 %v1069
        %1414 = vmatprep.subr.bf16.mxu0 %v1078
        %1415 = vmatpush1.bf16.msra.mxu0 %v1077
        %1416 = vmatprep.subr.bf16.mxu0 %v1086
        %1417 = vmatpush1.bf16.msra.mxu0 %v1085
        %1418 = vmatprep.subr.bf16.mxu0 %v1094
        %1419 = vmatpush1.bf16.msra.mxu0 %v1093
        %1420 = vmatprep.subr.bf16.mxu0 %v1102
        %1421 = vmatpush1.bf16.msra.mxu0 %v1101
        %1422 = vmatprep.mubr.bf16.mxu0 %v419
        %1423 = vmatmul.mubr.bf16.gmra.mrb[0].mxu0 %v418
        %v1424 = vpop.f32.mrb[0].mxu0
        %v1425 = vadd.f32 %v578, %v1424
        %v1426 = vpop.f32.mrb[0].mxu0
        %v1427 = vadd.f32 %v582, %v1426
        %v1428 = vpop.f32.mrb[0].mxu0
        %v1429 = vadd.f32 %v578, %v1428
        %v1430 = vpop.f32.mrb[0].mxu0
        %v1431 = vadd.f32 %v582, %v1430
        %1432 = vmatprep.mubr.bf16.mxu0 %v421
        %1433 = vmatmul.mubr.bf16.gmra.mrb[0].mxu0 %v420
        %v1434 = vpop.f32.mrb[0].mxu0
        %v1435 = vadd.f32 %v578, %v1434
        %v1436 = vpop.f32.mrb[0].mxu0
        %v1437 = vadd.f32 %v582, %v1436
        %v1438 = vpop.f32.mrb[0].mxu0
        %v1439 = vadd.f32 %v578, %v1438
        %v1440 = vpop.f32.mrb[0].mxu0
        %v1441 = vadd.f32 %v582, %v1440
        %1442 = vdwg.mxu0
        %v1443 = vmax.f32 %v1266, 0.0
        %v1444 = vmax.f32 %v1268, 0.0
        %v1445 = vmax.f32 %v1319, 0.0
        %v1446 = vmax.f32 %v1321, 0.0
        %v1447 = vmax.f32 %v1372, 0.0
        %v1448 = vmax.f32 %v1374, 0.0
        %v1449 = vmax.f32 %v1425, 0.0
        %v1450 = vmax.f32 %v1427, 0.0
        %v1451 = vmax.f32 %v1270, 0.0
        %v1452 = vmax.f32 %v1272, 0.0
        %v1453 = vmax.f32 %v1323, 0.0
        %v1454 = vmax.f32 %v1325, 0.0
        %v1455 = vmax.f32 %v1376, 0.0
        %v1456 = vmax.f32 %v1378, 0.0
        %v1457 = vmax.f32 %v1429, 0.0
        %v1458 = vmax.f32 %v1431, 0.0
        %v1459 = vmax.f32 %v1276, 0.0
        %v1460 = vmax.f32 %v1278, 0.0
        %v1461 = vmax.f32 %v1329, 0.0
        %v1462 = vmax.f32 %v1331, 0.0
        %v1463 = vmax.f32 %v1382, 0.0
        %v1464 = vmax.f32 %v1384, 0.0
        %v1465 = vmax.f32 %v1435, 0.0
        %v1466 = vmax.f32 %v1437, 0.0
        %v1467 = vmax.f32 %v1280, 0.0
        %v1468 = vmax.f32 %v1282, 0.0
        %v1469 = vmax.f32 %v1333, 0.0
        %v1470 = vmax.f32 %v1335, 0.0
        %v1471 = vmax.f32 %v1386, 0.0
        %v1472 = vmax.f32 %v1388, 0.0
        %v1473 = vmax.f32 %v1439, 0.0
        %v1474 = vmax.f32 %v1441, 0.0
        %v1475 = vpack.c.bf16 %v1451, %v1443
        %v1476 = vpack.c.bf16 %v1452, %v1444
        %v1477 = vpack.c.bf16 %v1453, %v1445
        %v1478 = vpack.c.bf16 %v1454, %v1446
        %v1479 = vpack.c.bf16 %v1455, %v1447
        %v1480 = vpack.c.bf16 %v1456, %v1448
        %v1481 = vpack.c.bf16 %v1457, %v1449
        %v1482 = vpack.c.bf16 %v1458, %v1450
        %v1483 = vpack.c.bf16 %v1467, %v1459
        %v1484 = vpack.c.bf16 %v1468, %v1460
        %v1485 = vpack.c.bf16 %v1469, %v1461
        %v1486 = vpack.c.bf16 %v1470, %v1462
        %v1487 = vpack.c.bf16 %v1471, %v1463
        %v1488 = vpack.c.bf16 %v1472, %v1464
        %v1489 = vpack.c.bf16 %v1473, %v1465
        %v1490 = vpack.c.bf16 %v1474, %v1466
        %v1491 = vld [vmem:[%s242] sm:$0xff]
        %v1492 = vld [vmem:[%s242 + $0x8] sm:$0xff]
        %v1493 = vld [vmem:[%s242 + $0x10] sm:$0xff]
        %v1494 = vld [vmem:[%s242 + $0x18] sm:$0xff]
        %v1495 = vld [vmem:[%s242 + $0x20] sm:$0xff]
        %v1496 = vld [vmem:[%s242 + $0x28] sm:$0xff]
        %v1497 = vld [vmem:[%s242 + $0x30] sm:$0xff]
        %v1498 = vld [vmem:[%s242 + $0x38] sm:$0xff]
        %v1499 = vld [vmem:[%s242 + $0x40] sm:$0xff]
        %v1500 = vld [vmem:[%s242 + $0x48] sm:$0xff]
        %v1501 = vld [vmem:[%s242 + $0x50] sm:$0xff]
        %v1502 = vld [vmem:[%s242 + $0x58] sm:$0xff]
        %v1503 = vld [vmem:[%s242 + $0x60] sm:$0xff]
        %v1504 = vld [vmem:[%s242 + $0x68] sm:$0xff]
        %v1505 = vld [vmem:[%s242 + $0x70] sm:$0xff]
        %v1506 = vld [vmem:[%s242 + $0x78] sm:$0xff]
        %v1507 = vld [vmem:[%s242 + $0x80] sm:$0xff]
        %v1508 = vld [vmem:[%s242 + $0x88] sm:$0xff]
        %v1509 = vld [vmem:[%s242 + $0x90] sm:$0xff]
        %v1510 = vld [vmem:[%s242 + $0x98] sm:$0xff]
        %v1511 = vld [vmem:[%s242 + $0xa0] sm:$0xff]
        %v1512 = vld [vmem:[%s242 + $0xa8] sm:$0xff]
        %v1513 = vld [vmem:[%s242 + $0xb0] sm:$0xff]
        %v1514 = vld [vmem:[%s242 + $0xb8] sm:$0xff]
        %v1515 = vld [vmem:[%s242 + $0xc0] sm:$0xff]
        %v1516 = vld [vmem:[%s242 + $0xc8] sm:$0xff]
        %v1517 = vld [vmem:[%s242 + $0xd0] sm:$0xff]
        %v1518 = vld [vmem:[%s242 + $0xd8] sm:$0xff]
        %v1519 = vld [vmem:[%s242 + $0xe0] sm:$0xff]
        %v1520 = vld [vmem:[%s242 + $0xe8] sm:$0xff]
        %v1521 = vld [vmem:[%s242 + $0xf0] sm:$0xff]
        %v1522 = vld [vmem:[%s242 + $0xf8] sm:$0xff]
        %v1523 = vld [vmem:[%s242 + $0x100] sm:$0xff]
        %v1524 = vld [vmem:[%s242 + $0x108] sm:$0xff]
        %v1525 = vld [vmem:[%s242 + $0x110] sm:$0xff]
        %v1526 = vld [vmem:[%s242 + $0x118] sm:$0xff]
        %v1527 = vld [vmem:[%s242 + $0x120] sm:$0xff]
        %v1528 = vld [vmem:[%s242 + $0x128] sm:$0xff]
        %v1529 = vld [vmem:[%s242 + $0x130] sm:$0xff]
        %v1530 = vld [vmem:[%s242 + $0x138] sm:$0xff]
        %v1531 = vld [vmem:[%s242 + $0x140] sm:$0xff]
        %v1532 = vld [vmem:[%s242 + $0x148] sm:$0xff]
        %v1533 = vld [vmem:[%s242 + $0x150] sm:$0xff]
        %v1534 = vld [vmem:[%s242 + $0x158] sm:$0xff]
        %v1535 = vld [vmem:[%s242 + $0x160] sm:$0xff]
        %v1536 = vld [vmem:[%s242 + $0x168] sm:$0xff]
        %v1537 = vld [vmem:[%s242 + $0x170] sm:$0xff]
        %v1538 = vld [vmem:[%s242 + $0x178] sm:$0xff]
        %v1539 = vld [vmem:[%s242 + $0x180] sm:$0xff]
        %v1540 = vld [vmem:[%s242 + $0x188] sm:$0xff]
        %v1541 = vld [vmem:[%s242 + $0x190] sm:$0xff]
        %v1542 = vld [vmem:[%s242 + $0x198] sm:$0xff]
        %v1543 = vld [vmem:[%s242 + $0x1a0] sm:$0xff]
        %v1544 = vld [vmem:[%s242 + $0x1a8] sm:$0xff]
        %v1545 = vld [vmem:[%s242 + $0x1b0] sm:$0xff]
        %v1546 = vld [vmem:[%s242 + $0x1b8] sm:$0xff]
        %v1547 = vld [vmem:[%s242 + $0x1c0] sm:$0xff]
        %v1548 = vld [vmem:[%s242 + $0x1c8] sm:$0xff]
        %v1549 = vld [vmem:[%s242 + $0x1d0] sm:$0xff]
        %v1550 = vld [vmem:[%s242 + $0x1d8] sm:$0xff]
        %v1551 = vld [vmem:[%s242 + $0x1e0] sm:$0xff]
        %v1552 = vld [vmem:[%s242 + $0x1e8] sm:$0xff]
        %v1553 = vld [vmem:[%s242 + $0x1f0] sm:$0xff]
        %v1554 = vld [vmem:[%s242 + $0x1f8] sm:$0xff]
        %v1555 = vld [vmem:[%s242 + $0x200] sm:$0xff]
        %v1556 = vld [vmem:[%s242 + $0x208] sm:$0xff]
        %v1557 = vld [vmem:[%s242 + $0x210] sm:$0xff]
        %v1558 = vld [vmem:[%s242 + $0x218] sm:$0xff]
        %v1559 = vld [vmem:[%s242 + $0x220] sm:$0xff]
        %v1560 = vld [vmem:[%s242 + $0x228] sm:$0xff]
        %v1561 = vld [vmem:[%s242 + $0x230] sm:$0xff]
        %v1562 = vld [vmem:[%s242 + $0x238] sm:$0xff]
        %v1563 = vld [vmem:[%s242 + $0x240] sm:$0xff]
        %v1564 = vld [vmem:[%s242 + $0x248] sm:$0xff]
        %v1565 = vld [vmem:[%s242 + $0x250] sm:$0xff]
        %v1566 = vld [vmem:[%s242 + $0x258] sm:$0xff]
        %v1567 = vld [vmem:[%s242 + $0x260] sm:$0xff]
        %v1568 = vld [vmem:[%s242 + $0x268] sm:$0xff]
        %v1569 = vld [vmem:[%s242 + $0x270] sm:$0xff]
        %v1570 = vld [vmem:[%s242 + $0x278] sm:$0xff]
        %v1571 = vld [vmem:[%s242 + $0x280] sm:$0xff]
        %v1572 = vld [vmem:[%s242 + $0x288] sm:$0xff]
        %v1573 = vld [vmem:[%s242 + $0x290] sm:$0xff]
        %v1574 = vld [vmem:[%s242 + $0x298] sm:$0xff]
        %v1575 = vld [vmem:[%s242 + $0x2a0] sm:$0xff]
        %v1576 = vld [vmem:[%s242 + $0x2a8] sm:$0xff]
        %v1577 = vld [vmem:[%s242 + $0x2b0] sm:$0xff]
        %v1578 = vld [vmem:[%s242 + $0x2b8] sm:$0xff]
        %v1579 = vld [vmem:[%s242 + $0x2c0] sm:$0xff]
        %v1580 = vld [vmem:[%s242 + $0x2c8] sm:$0xff]
        %v1581 = vld [vmem:[%s242 + $0x2d0] sm:$0xff]
        %v1582 = vld [vmem:[%s242 + $0x2d8] sm:$0xff]
        %v1583 = vld [vmem:[%s242 + $0x2e0] sm:$0xff]
        %v1584 = vld [vmem:[%s242 + $0x2e8] sm:$0xff]
        %v1585 = vld [vmem:[%s242 + $0x2f0] sm:$0xff]
        %v1586 = vld [vmem:[%s242 + $0x2f8] sm:$0xff]
        %v1587 = vld [vmem:[%s242 + $0x300] sm:$0xff]
        %v1588 = vld [vmem:[%s242 + $0x308] sm:$0xff]
        %v1589 = vld [vmem:[%s242 + $0x310] sm:$0xff]
        %v1590 = vld [vmem:[%s242 + $0x318] sm:$0xff]
        %v1591 = vld [vmem:[%s242 + $0x320] sm:$0xff]
        %v1592 = vld [vmem:[%s242 + $0x328] sm:$0xff]
        %v1593 = vld [vmem:[%s242 + $0x330] sm:$0xff]
        %v1594 = vld [vmem:[%s242 + $0x338] sm:$0xff]
        %v1595 = vld [vmem:[%s242 + $0x340] sm:$0xff]
        %v1596 = vld [vmem:[%s242 + $0x348] sm:$0xff]
        %v1597 = vld [vmem:[%s242 + $0x350] sm:$0xff]
        %v1598 = vld [vmem:[%s242 + $0x358] sm:$0xff]
        %v1599 = vld [vmem:[%s242 + $0x360] sm:$0xff]
        %v1600 = vld [vmem:[%s242 + $0x368] sm:$0xff]
        %v1601 = vld [vmem:[%s242 + $0x370] sm:$0xff]
        %v1602 = vld [vmem:[%s242 + $0x378] sm:$0xff]
        %v1603 = vld [vmem:[%s242 + $0x380] sm:$0xff]
        %v1604 = vld [vmem:[%s242 + $0x388] sm:$0xff]
        %v1605 = vld [vmem:[%s242 + $0x390] sm:$0xff]
        %v1606 = vld [vmem:[%s242 + $0x398] sm:$0xff]
        %v1607 = vld [vmem:[%s242 + $0x3a0] sm:$0xff]
        %v1608 = vld [vmem:[%s242 + $0x3a8] sm:$0xff]
        %v1609 = vld [vmem:[%s242 + $0x3b0] sm:$0xff]
        %v1610 = vld [vmem:[%s242 + $0x3b8] sm:$0xff]
        %v1611 = vld [vmem:[%s242 + $0x3c0] sm:$0xff]
        %v1612 = vld [vmem:[%s242 + $0x3c8] sm:$0xff]
        %v1613 = vld [vmem:[%s242 + $0x3d0] sm:$0xff]
        %v1614 = vld [vmem:[%s242 + $0x3d8] sm:$0xff]
        %v1615 = vld [vmem:[%s242 + $0x3e0] sm:$0xff]
        %v1616 = vld [vmem:[%s242 + $0x3e8] sm:$0xff]
        %v1617 = vld [vmem:[%s242 + $0x3f0] sm:$0xff]
        %v1618 = vld [vmem:[%s242 + $0x3f8] sm:$0xff]
        %v1620 = vlaneseq
        %v1621 = vshrl.u32 %v1620, 7
        %v1622 = vsub.s32 0, %v1621
        %v1623 = vrot.slane %v306, %v1622
        %v1624 = vlaneseq
        %v1625 = vshrl.u32 %v1624, 7
        %v1626 = vsub.s32 1, %v1625
        %v1627 = vrot.slane %v306, %v1626
        %v1758 = vunpack.c.l.b16 %v1491
        %v1759 = vunpack.c.h.b16 %v1491
        %v1760 = vunpack.c.l.b16 %v1492
        %v1761 = vunpack.c.h.b16 %v1492
        %v1762 = vunpack.c.l.b16 %v1493
        %v1763 = vunpack.c.h.b16 %v1493
        %v1764 = vunpack.c.l.b16 %v1494
        %v1765 = vunpack.c.h.b16 %v1494
        %v1766 = vunpack.c.l.b16 %v1495
        %v1767 = vunpack.c.h.b16 %v1495
        %v1768 = vunpack.c.l.b16 %v1496
        %v1769 = vunpack.c.h.b16 %v1496
        %v1770 = vunpack.c.l.b16 %v1497
        %v1771 = vunpack.c.h.b16 %v1497
        %v1772 = vunpack.c.l.b16 %v1498
        %v1773 = vunpack.c.h.b16 %v1498
        %v1774 = vunpack.c.l.b16 %v1499
        %v1775 = vunpack.c.h.b16 %v1499
        %v1776 = vunpack.c.l.b16 %v1500
        %v1777 = vunpack.c.h.b16 %v1500
        %v1778 = vunpack.c.l.b16 %v1501
        %v1779 = vunpack.c.h.b16 %v1501
        %v1780 = vunpack.c.l.b16 %v1502
        %v1781 = vunpack.c.h.b16 %v1502
        %v1782 = vunpack.c.l.b16 %v1503
        %v1783 = vunpack.c.h.b16 %v1503
        %v1784 = vunpack.c.l.b16 %v1504
        %v1785 = vunpack.c.h.b16 %v1504
        %v1786 = vunpack.c.l.b16 %v1505
        %v1787 = vunpack.c.h.b16 %v1505
        %v1788 = vunpack.c.l.b16 %v1506
        %v1789 = vunpack.c.h.b16 %v1506
        %v1790 = vunpack.c.l.b16 %v1507
        %v1791 = vunpack.c.h.b16 %v1507
        %v1792 = vunpack.c.l.b16 %v1508
        %v1793 = vunpack.c.h.b16 %v1508
        %v1794 = vunpack.c.l.b16 %v1509
        %v1795 = vunpack.c.h.b16 %v1509
        %v1796 = vunpack.c.l.b16 %v1510
        %v1797 = vunpack.c.h.b16 %v1510
        %v1798 = vunpack.c.l.b16 %v1511
        %v1799 = vunpack.c.h.b16 %v1511
        %v1800 = vunpack.c.l.b16 %v1512
        %v1801 = vunpack.c.h.b16 %v1512
        %v1802 = vunpack.c.l.b16 %v1513
        %v1803 = vunpack.c.h.b16 %v1513
        %v1804 = vunpack.c.l.b16 %v1514
        %v1805 = vunpack.c.h.b16 %v1514
        %v1806 = vunpack.c.l.b16 %v1515
        %v1807 = vunpack.c.h.b16 %v1515
        %v1808 = vunpack.c.l.b16 %v1516
        %v1809 = vunpack.c.h.b16 %v1516
        %v1810 = vunpack.c.l.b16 %v1517
        %v1811 = vunpack.c.h.b16 %v1517
        %v1812 = vunpack.c.l.b16 %v1518
        %v1813 = vunpack.c.h.b16 %v1518
        %v1814 = vunpack.c.l.b16 %v1519
        %v1815 = vunpack.c.h.b16 %v1519
        %v1816 = vunpack.c.l.b16 %v1520
        %v1817 = vunpack.c.h.b16 %v1520
        %v1818 = vunpack.c.l.b16 %v1521
        %v1819 = vunpack.c.h.b16 %v1521
        %v1820 = vunpack.c.l.b16 %v1522
        %v1821 = vunpack.c.h.b16 %v1522
        %v1822 = vunpack.c.l.b16 %v1523
        %v1823 = vunpack.c.h.b16 %v1523
        %v1824 = vunpack.c.l.b16 %v1524
        %v1825 = vunpack.c.h.b16 %v1524
        %v1826 = vunpack.c.l.b16 %v1525
        %v1827 = vunpack.c.h.b16 %v1525
        %v1828 = vunpack.c.l.b16 %v1526
        %v1829 = vunpack.c.h.b16 %v1526
        %v1830 = vunpack.c.l.b16 %v1527
        %v1831 = vunpack.c.h.b16 %v1527
        %v1832 = vunpack.c.l.b16 %v1528
        %v1833 = vunpack.c.h.b16 %v1528
        %v1834 = vunpack.c.l.b16 %v1529
        %v1835 = vunpack.c.h.b16 %v1529
        %v1836 = vunpack.c.l.b16 %v1530
        %v1837 = vunpack.c.h.b16 %v1530
        %v1838 = vunpack.c.l.b16 %v1531
        %v1839 = vunpack.c.h.b16 %v1531
        %v1840 = vunpack.c.l.b16 %v1532
        %v1841 = vunpack.c.h.b16 %v1532
        %v1842 = vunpack.c.l.b16 %v1533
        %v1843 = vunpack.c.h.b16 %v1533
        %v1844 = vunpack.c.l.b16 %v1534
        %v1845 = vunpack.c.h.b16 %v1534
        %v1846 = vunpack.c.l.b16 %v1535
        %v1847 = vunpack.c.h.b16 %v1535
        %v1848 = vunpack.c.l.b16 %v1536
        %v1849 = vunpack.c.h.b16 %v1536
        %v1850 = vunpack.c.l.b16 %v1537
        %v1851 = vunpack.c.h.b16 %v1537
        %v1852 = vunpack.c.l.b16 %v1538
        %v1853 = vunpack.c.h.b16 %v1538
        %v1854 = vunpack.c.l.b16 %v1539
        %v1855 = vunpack.c.h.b16 %v1539
        %v1856 = vunpack.c.l.b16 %v1540
        %v1857 = vunpack.c.h.b16 %v1540
        %v1858 = vunpack.c.l.b16 %v1541
        %v1859 = vunpack.c.h.b16 %v1541
        %v1860 = vunpack.c.l.b16 %v1542
        %v1861 = vunpack.c.h.b16 %v1542
        %v1862 = vunpack.c.l.b16 %v1543
        %v1863 = vunpack.c.h.b16 %v1543
        %v1864 = vunpack.c.l.b16 %v1544
        %v1865 = vunpack.c.h.b16 %v1544
        %v1866 = vunpack.c.l.b16 %v1545
        %v1867 = vunpack.c.h.b16 %v1545
        %v1868 = vunpack.c.l.b16 %v1546
        %v1869 = vunpack.c.h.b16 %v1546
        %v1870 = vunpack.c.l.b16 %v1547
        %v1871 = vunpack.c.h.b16 %v1547
        %v1872 = vunpack.c.l.b16 %v1548
        %v1873 = vunpack.c.h.b16 %v1548
        %v1874 = vunpack.c.l.b16 %v1549
        %v1875 = vunpack.c.h.b16 %v1549
        %v1876 = vunpack.c.l.b16 %v1550
        %v1877 = vunpack.c.h.b16 %v1550
        %v1878 = vunpack.c.l.b16 %v1551
        %v1879 = vunpack.c.h.b16 %v1551
        %v1880 = vunpack.c.l.b16 %v1552
        %v1881 = vunpack.c.h.b16 %v1552
        %v1882 = vunpack.c.l.b16 %v1553
        %v1883 = vunpack.c.h.b16 %v1553
        %v1884 = vunpack.c.l.b16 %v1554
        %v1885 = vunpack.c.h.b16 %v1554
        %v1886 = vunpack.c.l.b16 %v1555
        %v1887 = vunpack.c.h.b16 %v1555
        %v1888 = vunpack.c.l.b16 %v1556
        %v1889 = vunpack.c.h.b16 %v1556
        %v1890 = vunpack.c.l.b16 %v1557
        %v1891 = vunpack.c.h.b16 %v1557
        %v1892 = vunpack.c.l.b16 %v1558
        %v1893 = vunpack.c.h.b16 %v1558
        %v1894 = vunpack.c.l.b16 %v1559
        %v1895 = vunpack.c.h.b16 %v1559
        %v1896 = vunpack.c.l.b16 %v1560
        %v1897 = vunpack.c.h.b16 %v1560
        %v1898 = vunpack.c.l.b16 %v1561
        %v1899 = vunpack.c.h.b16 %v1561
        %v1900 = vunpack.c.l.b16 %v1562
        %v1901 = vunpack.c.h.b16 %v1562
        %v1902 = vunpack.c.l.b16 %v1563
        %v1903 = vunpack.c.h.b16 %v1563
        %v1904 = vunpack.c.l.b16 %v1564
        %v1905 = vunpack.c.h.b16 %v1564
        %v1906 = vunpack.c.l.b16 %v1565
        %v1907 = vunpack.c.h.b16 %v1565
        %v1908 = vunpack.c.l.b16 %v1566
        %v1909 = vunpack.c.h.b16 %v1566
        %v1910 = vunpack.c.l.b16 %v1567
        %v1911 = vunpack.c.h.b16 %v1567
        %v1912 = vunpack.c.l.b16 %v1568
        %v1913 = vunpack.c.h.b16 %v1568
        %v1914 = vunpack.c.l.b16 %v1569
        %v1915 = vunpack.c.h.b16 %v1569
        %v1916 = vunpack.c.l.b16 %v1570
        %v1917 = vunpack.c.h.b16 %v1570
        %v1918 = vunpack.c.l.b16 %v1571
        %v1919 = vunpack.c.h.b16 %v1571
        %v1920 = vunpack.c.l.b16 %v1572
        %v1921 = vunpack.c.h.b16 %v1572
        %v1922 = vunpack.c.l.b16 %v1573
        %v1923 = vunpack.c.h.b16 %v1573
        %v1924 = vunpack.c.l.b16 %v1574
        %v1925 = vunpack.c.h.b16 %v1574
        %v1926 = vunpack.c.l.b16 %v1575
        %v1927 = vunpack.c.h.b16 %v1575
        %v1928 = vunpack.c.l.b16 %v1576
        %v1929 = vunpack.c.h.b16 %v1576
        %v1930 = vunpack.c.l.b16 %v1577
        %v1931 = vunpack.c.h.b16 %v1577
        %v1932 = vunpack.c.l.b16 %v1578
        %v1933 = vunpack.c.h.b16 %v1578
        %v1934 = vunpack.c.l.b16 %v1579
        %v1935 = vunpack.c.h.b16 %v1579
        %v1936 = vunpack.c.l.b16 %v1580
        %v1937 = vunpack.c.h.b16 %v1580
        %v1938 = vunpack.c.l.b16 %v1581
        %v1939 = vunpack.c.h.b16 %v1581
        %v1940 = vunpack.c.l.b16 %v1582
        %v1941 = vunpack.c.h.b16 %v1582
        %v1942 = vunpack.c.l.b16 %v1583
        %v1943 = vunpack.c.h.b16 %v1583
        %v1944 = vunpack.c.l.b16 %v1584
        %v1945 = vunpack.c.h.b16 %v1584
        %v1946 = vunpack.c.l.b16 %v1585
        %v1947 = vunpack.c.h.b16 %v1585
        %v1948 = vunpack.c.l.b16 %v1586
        %v1949 = vunpack.c.h.b16 %v1586
        %v1950 = vunpack.c.l.b16 %v1587
        %v1951 = vunpack.c.h.b16 %v1587
        %v1952 = vunpack.c.l.b16 %v1588
        %v1953 = vunpack.c.h.b16 %v1588
        %v1954 = vunpack.c.l.b16 %v1589
        %v1955 = vunpack.c.h.b16 %v1589
        %v1956 = vunpack.c.l.b16 %v1590
        %v1957 = vunpack.c.h.b16 %v1590
        %v1958 = vunpack.c.l.b16 %v1591
        %v1959 = vunpack.c.h.b16 %v1591
        %v1960 = vunpack.c.l.b16 %v1592
        %v1961 = vunpack.c.h.b16 %v1592
        %v1962 = vunpack.c.l.b16 %v1593
        %v1963 = vunpack.c.h.b16 %v1593
        %v1964 = vunpack.c.l.b16 %v1594
        %v1965 = vunpack.c.h.b16 %v1594
        %v1966 = vunpack.c.l.b16 %v1595
        %v1967 = vunpack.c.h.b16 %v1595
        %v1968 = vunpack.c.l.b16 %v1596
        %v1969 = vunpack.c.h.b16 %v1596
        %v1970 = vunpack.c.l.b16 %v1597
        %v1971 = vunpack.c.h.b16 %v1597
        %v1972 = vunpack.c.l.b16 %v1598
        %v1973 = vunpack.c.h.b16 %v1598
        %v1974 = vunpack.c.l.b16 %v1599
        %v1975 = vunpack.c.h.b16 %v1599
        %v1976 = vunpack.c.l.b16 %v1600
        %v1977 = vunpack.c.h.b16 %v1600
        %v1978 = vunpack.c.l.b16 %v1601
        %v1979 = vunpack.c.h.b16 %v1601
        %v1980 = vunpack.c.l.b16 %v1602
        %v1981 = vunpack.c.h.b16 %v1602
        %v1982 = vunpack.c.l.b16 %v1603
        %v1983 = vunpack.c.h.b16 %v1603
        %v1984 = vunpack.c.l.b16 %v1604
        %v1985 = vunpack.c.h.b16 %v1604
        %v1986 = vunpack.c.l.b16 %v1605
        %v1987 = vunpack.c.h.b16 %v1605
        %v1988 = vunpack.c.l.b16 %v1606
        %v1989 = vunpack.c.h.b16 %v1606
        %v1990 = vunpack.c.l.b16 %v1607
        %v1991 = vunpack.c.h.b16 %v1607
        %v1992 = vunpack.c.l.b16 %v1608
        %v1993 = vunpack.c.h.b16 %v1608
        %v1994 = vunpack.c.l.b16 %v1609
        %v1995 = vunpack.c.h.b16 %v1609
        %v1996 = vunpack.c.l.b16 %v1610
        %v1997 = vunpack.c.h.b16 %v1610
        %v1998 = vunpack.c.l.b16 %v1611
        %v1999 = vunpack.c.h.b16 %v1611
        %v2000 = vunpack.c.l.b16 %v1612
        %v2001 = vunpack.c.h.b16 %v1612
        %v2002 = vunpack.c.l.b16 %v1613
        %v2003 = vunpack.c.h.b16 %v1613
        %v2004 = vunpack.c.l.b16 %v1614
        %v2005 = vunpack.c.h.b16 %v1614
        %v2006 = vunpack.c.l.b16 %v1615
        %v2007 = vunpack.c.h.b16 %v1615
        %v2008 = vunpack.c.l.b16 %v1616
        %v2009 = vunpack.c.h.b16 %v1616
        %v2010 = vunpack.c.l.b16 %v1617
        %v2011 = vunpack.c.h.b16 %v1617
        %v2012 = vunpack.c.l.b16 %v1618
        %v2013 = vunpack.c.h.b16 %v1618
        %v2014 = vpack.c.b16 %v1760, %v1758
        %v2015 = vpack.c.b16 %v1761, %v1759
        %v2016 = vpack.c.b16 %v1764, %v1762
        %v2017 = vpack.c.b16 %v1765, %v1763
        %v2018 = vpack.c.b16 %v1768, %v1766
        %v2019 = vpack.c.b16 %v1769, %v1767
        %v2020 = vpack.c.b16 %v1772, %v1770
        %v2021 = vpack.c.b16 %v1773, %v1771
        %v2022 = vpack.c.b16 %v1776, %v1774
        %v2023 = vpack.c.b16 %v1777, %v1775
        %v2024 = vpack.c.b16 %v1780, %v1778
        %v2025 = vpack.c.b16 %v1781, %v1779
        %v2026 = vpack.c.b16 %v1784, %v1782
        %v2027 = vpack.c.b16 %v1785, %v1783
        %v2028 = vpack.c.b16 %v1788, %v1786
        %v2029 = vpack.c.b16 %v1789, %v1787
        %v2030 = vpack.c.b16 %v1792, %v1790
        %v2031 = vpack.c.b16 %v1793, %v1791
        %v2032 = vpack.c.b16 %v1796, %v1794
        %v2033 = vpack.c.b16 %v1797, %v1795
        %v2034 = vpack.c.b16 %v1800, %v1798
        %v2035 = vpack.c.b16 %v1801, %v1799
        %v2036 = vpack.c.b16 %v1804, %v1802
        %v2037 = vpack.c.b16 %v1805, %v1803
        %v2038 = vpack.c.b16 %v1808, %v1806
        %v2039 = vpack.c.b16 %v1809, %v1807
        %v2040 = vpack.c.b16 %v1812, %v1810
        %v2041 = vpack.c.b16 %v1813, %v1811
        %v2042 = vpack.c.b16 %v1816, %v1814
        %v2043 = vpack.c.b16 %v1817, %v1815
        %v2044 = vpack.c.b16 %v1820, %v1818
        %v2045 = vpack.c.b16 %v1821, %v1819
        %v2046 = vpack.c.b16 %v1824, %v1822
        %v2047 = vpack.c.b16 %v1825, %v1823
        %v2048 = vpack.c.b16 %v1828, %v1826
        %v2049 = vpack.c.b16 %v1829, %v1827
        %v2050 = vpack.c.b16 %v1832, %v1830
        %v2051 = vpack.c.b16 %v1833, %v1831
        %v2052 = vpack.c.b16 %v1836, %v1834
        %v2053 = vpack.c.b16 %v1837, %v1835
        %v2054 = vpack.c.b16 %v1840, %v1838
        %v2055 = vpack.c.b16 %v1841, %v1839
        %v2056 = vpack.c.b16 %v1844, %v1842
        %v2057 = vpack.c.b16 %v1845, %v1843
        %v2058 = vpack.c.b16 %v1848, %v1846
        %v2059 = vpack.c.b16 %v1849, %v1847
        %v2060 = vpack.c.b16 %v1852, %v1850
        %v2061 = vpack.c.b16 %v1853, %v1851
        %v2062 = vpack.c.b16 %v1856, %v1854
        %v2063 = vpack.c.b16 %v1857, %v1855
        %v2064 = vpack.c.b16 %v1860, %v1858
        %v2065 = vpack.c.b16 %v1861, %v1859
        %v2066 = vpack.c.b16 %v1864, %v1862
        %v2067 = vpack.c.b16 %v1865, %v1863
        %v2068 = vpack.c.b16 %v1868, %v1866
        %v2069 = vpack.c.b16 %v1869, %v1867
        %v2070 = vpack.c.b16 %v1872, %v1870
        %v2071 = vpack.c.b16 %v1873, %v1871
        %v2072 = vpack.c.b16 %v1876, %v1874
        %v2073 = vpack.c.b16 %v1877, %v1875
        %v2074 = vpack.c.b16 %v1880, %v1878
        %v2075 = vpack.c.b16 %v1881, %v1879
        %v2076 = vpack.c.b16 %v1884, %v1882
        %v2077 = vpack.c.b16 %v1885, %v1883
        %v2078 = vpack.c.b16 %v1888, %v1886
        %v2079 = vpack.c.b16 %v1889, %v1887
        %v2080 = vpack.c.b16 %v1892, %v1890
        %v2081 = vpack.c.b16 %v1893, %v1891
        %v2082 = vpack.c.b16 %v1896, %v1894
        %v2083 = vpack.c.b16 %v1897, %v1895
        %v2084 = vpack.c.b16 %v1900, %v1898
        %v2085 = vpack.c.b16 %v1901, %v1899
        %v2086 = vpack.c.b16 %v1904, %v1902
        %v2087 = vpack.c.b16 %v1905, %v1903
        %v2088 = vpack.c.b16 %v1908, %v1906
        %v2089 = vpack.c.b16 %v1909, %v1907
        %v2090 = vpack.c.b16 %v1912, %v1910
        %v2091 = vpack.c.b16 %v1913, %v1911
        %v2092 = vpack.c.b16 %v1916, %v1914
        %v2093 = vpack.c.b16 %v1917, %v1915
        %v2094 = vpack.c.b16 %v1920, %v1918
        %v2095 = vpack.c.b16 %v1921, %v1919
        %v2096 = vpack.c.b16 %v1924, %v1922
        %v2097 = vpack.c.b16 %v1925, %v1923
        %v2098 = vpack.c.b16 %v1928, %v1926
        %v2099 = vpack.c.b16 %v1929, %v1927
        %v2100 = vpack.c.b16 %v1932, %v1930
        %v2101 = vpack.c.b16 %v1933, %v1931
        %v2102 = vpack.c.b16 %v1936, %v1934
        %v2103 = vpack.c.b16 %v1937, %v1935
        %v2104 = vpack.c.b16 %v1940, %v1938
        %v2105 = vpack.c.b16 %v1941, %v1939
        %v2106 = vpack.c.b16 %v1944, %v1942
        %v2107 = vpack.c.b16 %v1945, %v1943
        %v2108 = vpack.c.b16 %v1948, %v1946
        %v2109 = vpack.c.b16 %v1949, %v1947
        %v2110 = vpack.c.b16 %v1952, %v1950
        %v2111 = vpack.c.b16 %v1953, %v1951
        %v2112 = vpack.c.b16 %v1956, %v1954
        %v2113 = vpack.c.b16 %v1957, %v1955
        %v2114 = vpack.c.b16 %v1960, %v1958
        %v2115 = vpack.c.b16 %v1961, %v1959
        %v2116 = vpack.c.b16 %v1964, %v1962
        %v2117 = vpack.c.b16 %v1965, %v1963
        %v2118 = vpack.c.b16 %v1968, %v1966
        %v2119 = vpack.c.b16 %v1969, %v1967
        %v2120 = vpack.c.b16 %v1972, %v1970
        %v2121 = vpack.c.b16 %v1973, %v1971
        %v2122 = vpack.c.b16 %v1976, %v1974
        %v2123 = vpack.c.b16 %v1977, %v1975
        %v2124 = vpack.c.b16 %v1980, %v1978
        %v2125 = vpack.c.b16 %v1981, %v1979
        %v2126 = vpack.c.b16 %v1984, %v1982
        %v2127 = vpack.c.b16 %v1985, %v1983
        %v2128 = vpack.c.b16 %v1988, %v1986
        %v2129 = vpack.c.b16 %v1989, %v1987
        %v2130 = vpack.c.b16 %v1992, %v1990
        %v2131 = vpack.c.b16 %v1993, %v1991
        %v2132 = vpack.c.b16 %v1996, %v1994
        %v2133 = vpack.c.b16 %v1997, %v1995
        %v2134 = vpack.c.b16 %v2000, %v1998
        %v2135 = vpack.c.b16 %v2001, %v1999
        %v2136 = vpack.c.b16 %v2004, %v2002
        %v2137 = vpack.c.b16 %v2005, %v2003
        %v2138 = vpack.c.b16 %v2008, %v2006
        %v2139 = vpack.c.b16 %v2009, %v2007
        %v2140 = vpack.c.b16 %v2012, %v2010
        %v2141 = vpack.c.b16 %v2013, %v2011
        %2270 = vmatprep.subr.bf16.mxu0 %v2015
        %2271 = vmatpush1.bf16.msra.mxu0 %v2014
        %2272 = vmatprep.subr.bf16.mxu0 %v2017
        %2273 = vmatpush1.bf16.msra.mxu0 %v2016
        %2274 = vmatprep.subr.bf16.mxu0 %v2019
        %2275 = vmatpush1.bf16.msra.mxu0 %v2018
        %2276 = vmatprep.subr.bf16.mxu0 %v2021
        %2277 = vmatpush1.bf16.msra.mxu0 %v2020
        %2278 = vmatprep.subr.bf16.mxu0 %v2023
        %2279 = vmatpush1.bf16.msra.mxu0 %v2022
        %2280 = vmatprep.subr.bf16.mxu0 %v2025
        %2281 = vmatpush1.bf16.msra.mxu0 %v2024
        %2282 = vmatprep.subr.bf16.mxu0 %v2027
        %2283 = vmatpush1.bf16.msra.mxu0 %v2026
        %2284 = vmatprep.subr.bf16.mxu0 %v2029
        %2285 = vmatpush1.bf16.msra.mxu0 %v2028
        %2286 = vmatprep.subr.bf16.mxu0 %v2031
        %2287 = vmatpush1.bf16.msra.mxu0 %v2030
        %2288 = vmatprep.subr.bf16.mxu0 %v2033
        %2289 = vmatpush1.bf16.msra.mxu0 %v2032
        %2290 = vmatprep.subr.bf16.mxu0 %v2035
        %2291 = vmatpush1.bf16.msra.mxu0 %v2034
        %2292 = vmatprep.subr.bf16.mxu0 %v2037
        %2293 = vmatpush1.bf16.msra.mxu0 %v2036
        %2294 = vmatprep.subr.bf16.mxu0 %v2039
        %2295 = vmatpush1.bf16.msra.mxu0 %v2038
        %2296 = vmatprep.subr.bf16.mxu0 %v2041
        %2297 = vmatpush1.bf16.msra.mxu0 %v2040
        %2298 = vmatprep.subr.bf16.mxu0 %v2043
        %2299 = vmatpush1.bf16.msra.mxu0 %v2042
        %2300 = vmatprep.subr.bf16.mxu0 %v2045
        %2301 = vmatpush1.bf16.msra.mxu0 %v2044
        %2302 = vmatprep.mubr.bf16.mxu0 %v1476
        %2303 = vmatmul.mubr.bf16.gmra.mrb[0].mxu0 %v1475
        %v2304 = vpop.f32.mrb[0].mxu0
        %v2305 = vadd.f32 %v1623, %v2304
        %v2306 = vpop.f32.mrb[0].mxu0
        %v2307 = vadd.f32 %v1627, %v2306
        %v2308 = vpop.f32.mrb[0].mxu0
        %v2309 = vadd.f32 %v1623, %v2308
        %v2310 = vpop.f32.mrb[0].mxu0
        %v2311 = vadd.f32 %v1627, %v2310
        %2312 = vmatprep.mubr.bf16.mxu0 %v1484
        %2313 = vmatmul.mubr.bf16.gmra.mrb[0].mxu0 %v1483
        %v2314 = vpop.f32.mrb[0].mxu0
        %v2315 = vadd.f32 %v1623, %v2314
        %v2316 = vpop.f32.mrb[0].mxu0
        %v2317 = vadd.f32 %v1627, %v2316
        %v2318 = vpop.f32.mrb[0].mxu0
        %v2319 = vadd.f32 %v1623, %v2318
        %v2320 = vpop.f32.mrb[0].mxu0
        %v2321 = vadd.f32 %v1627, %v2320
        %2322 = vdwg.mxu0
        %2323 = vmatprep.subr.bf16.mxu0 %v2047
        %2324 = vmatpush1.bf16.msra.mxu0 %v2046
        %2325 = vmatprep.subr.bf16.mxu0 %v2049
        %2326 = vmatpush1.bf16.msra.mxu0 %v2048
        %2327 = vmatprep.subr.bf16.mxu0 %v2051
        %2328 = vmatpush1.bf16.msra.mxu0 %v2050
        %2329 = vmatprep.subr.bf16.mxu0 %v2053
        %2330 = vmatpush1.bf16.msra.mxu0 %v2052
        %2331 = vmatprep.subr.bf16.mxu0 %v2055
        %2332 = vmatpush1.bf16.msra.mxu0 %v2054
        %2333 = vmatprep.subr.bf16.mxu0 %v2057
        %2334 = vmatpush1.bf16.msra.mxu0 %v2056
        %2335 = vmatprep.subr.bf16.mxu0 %v2059
        %2336 = vmatpush1.bf16.msra.mxu0 %v2058
        %2337 = vmatprep.subr.bf16.mxu0 %v2061
        %2338 = vmatpush1.bf16.msra.mxu0 %v2060
        %2339 = vmatprep.subr.bf16.mxu0 %v2063
        %2340 = vmatpush1.bf16.msra.mxu0 %v2062
        %2341 = vmatprep.subr.bf16.mxu0 %v2065
        %2342 = vmatpush1.bf16.msra.mxu0 %v2064
        %2343 = vmatprep.subr.bf16.mxu0 %v2067
        %2344 = vmatpush1.bf16.msra.mxu0 %v2066
        %2345 = vmatprep.subr.bf16.mxu0 %v2069
        %2346 = vmatpush1.bf16.msra.mxu0 %v2068
        %2347 = vmatprep.subr.bf16.mxu0 %v2071
        %2348 = vmatpush1.bf16.msra.mxu0 %v2070
        %2349 = vmatprep.subr.bf16.mxu0 %v2073
        %2350 = vmatpush1.bf16.msra.mxu0 %v2072
        %2351 = vmatprep.subr.bf16.mxu0 %v2075
        %2352 = vmatpush1.bf16.msra.mxu0 %v2074
        %2353 = vmatprep.subr.bf16.mxu0 %v2077
        %2354 = vmatpush1.bf16.msra.mxu0 %v2076
        %2355 = vmatprep.mubr.bf16.mxu0 %v1478
        %2356 = vmatmul.mubr.bf16.gmra.mrb[0].mxu0 %v1477
        %v2357 = vpop.f32.mrb[0].mxu0
        %v2358 = vadd.f32 %v2305, %v2357
        %v2359 = vpop.f32.mrb[0].mxu0
        %v2360 = vadd.f32 %v2307, %v2359
        %v2361 = vpop.f32.mrb[0].mxu0
        %v2362 = vadd.f32 %v2309, %v2361
        %v2363 = vpop.f32.mrb[0].mxu0
        %v2364 = vadd.f32 %v2311, %v2363
        %2365 = vmatprep.mubr.bf16.mxu0 %v1486
        %2366 = vmatmul.mubr.bf16.gmra.mrb[0].mxu0 %v1485
        %v2367 = vpop.f32.mrb[0].mxu0
        %v2368 = vadd.f32 %v2315, %v2367
        %v2369 = vpop.f32.mrb[0].mxu0
        %v2370 = vadd.f32 %v2317, %v2369
        %v2371 = vpop.f32.mrb[0].mxu0
        %v2372 = vadd.f32 %v2319, %v2371
        %v2373 = vpop.f32.mrb[0].mxu0
        %v2374 = vadd.f32 %v2321, %v2373
        %2375 = vdwg.mxu0
        %2376 = vmatprep.subr.bf16.mxu0 %v2079
        %2377 = vmatpush1.bf16.msra.mxu0 %v2078
        %2378 = vmatprep.subr.bf16.mxu0 %v2081
        %2379 = vmatpush1.bf16.msra.mxu0 %v2080
        %2380 = vmatprep.subr.bf16.mxu0 %v2083
        %2381 = vmatpush1.bf16.msra.mxu0 %v2082
        %2382 = vmatprep.subr.bf16.mxu0 %v2085
        %2383 = vmatpush1.bf16.msra.mxu0 %v2084
        %2384 = vmatprep.subr.bf16.mxu0 %v2087
        %2385 = vmatpush1.bf16.msra.mxu0 %v2086
        %2386 = vmatprep.subr.bf16.mxu0 %v2089
        %2387 = vmatpush1.bf16.msra.mxu0 %v2088
        %2388 = vmatprep.subr.bf16.mxu0 %v2091
        %2389 = vmatpush1.bf16.msra.mxu0 %v2090
        %2390 = vmatprep.subr.bf16.mxu0 %v2093
        %2391 = vmatpush1.bf16.msra.mxu0 %v2092
        %2392 = vmatprep.subr.bf16.mxu0 %v2095
        %2393 = vmatpush1.bf16.msra.mxu0 %v2094
        %2394 = vmatprep.subr.bf16.mxu0 %v2097
        %2395 = vmatpush1.bf16.msra.mxu0 %v2096
        %2396 = vmatprep.subr.bf16.mxu0 %v2099
        %2397 = vmatpush1.bf16.msra.mxu0 %v2098
        %2398 = vmatprep.subr.bf16.mxu0 %v2101
        %2399 = vmatpush1.bf16.msra.mxu0 %v2100
        %2400 = vmatprep.subr.bf16.mxu0 %v2103
        %2401 = vmatpush1.bf16.msra.mxu0 %v2102
        %2402 = vmatprep.subr.bf16.mxu0 %v2105
        %2403 = vmatpush1.bf16.msra.mxu0 %v2104
        %2404 = vmatprep.subr.bf16.mxu0 %v2107
        %2405 = vmatpush1.bf16.msra.mxu0 %v2106
        %2406 = vmatprep.subr.bf16.mxu0 %v2109
        %2407 = vmatpush1.bf16.msra.mxu0 %v2108
        %2408 = vmatprep.mubr.bf16.mxu0 %v1480
        %2409 = vmatmul.mubr.bf16.gmra.mrb[0].mxu0 %v1479
        %v2410 = vpop.f32.mrb[0].mxu0
        %v2411 = vadd.f32 %v2358, %v2410
        %v2412 = vpop.f32.mrb[0].mxu0
        %v2413 = vadd.f32 %v2360, %v2412
        %v2414 = vpop.f32.mrb[0].mxu0
        %v2415 = vadd.f32 %v2362, %v2414
        %v2416 = vpop.f32.mrb[0].mxu0
        %v2417 = vadd.f32 %v2364, %v2416
        %2418 = vmatprep.mubr.bf16.mxu0 %v1488
        %2419 = vmatmul.mubr.bf16.gmra.mrb[0].mxu0 %v1487
        %v2420 = vpop.f32.mrb[0].mxu0
        %v2421 = vadd.f32 %v2368, %v2420
        %v2422 = vpop.f32.mrb[0].mxu0
        %v2423 = vadd.f32 %v2370, %v2422
        %v2424 = vpop.f32.mrb[0].mxu0
        %v2425 = vadd.f32 %v2372, %v2424
        %v2426 = vpop.f32.mrb[0].mxu0
        %v2427 = vadd.f32 %v2374, %v2426
        %2428 = vdwg.mxu0
        %2429 = vmatprep.subr.bf16.mxu0 %v2111
        %2430 = vmatpush1.bf16.msra.mxu0 %v2110
        %2431 = vmatprep.subr.bf16.mxu0 %v2113
        %2432 = vmatpush1.bf16.msra.mxu0 %v2112
        %2433 = vmatprep.subr.bf16.mxu0 %v2115
        %2434 = vmatpush1.bf16.msra.mxu0 %v2114
        %2435 = vmatprep.subr.bf16.mxu0 %v2117
        %2436 = vmatpush1.bf16.msra.mxu0 %v2116
        %2437 = vmatprep.subr.bf16.mxu0 %v2119
        %2438 = vmatpush1.bf16.msra.mxu0 %v2118
        %2439 = vmatprep.subr.bf16.mxu0 %v2121
        %2440 = vmatpush1.bf16.msra.mxu0 %v2120
        %2441 = vmatprep.subr.bf16.mxu0 %v2123
        %2442 = vmatpush1.bf16.msra.mxu0 %v2122
        %2443 = vmatprep.subr.bf16.mxu0 %v2125
        %2444 = vmatpush1.bf16.msra.mxu0 %v2124
        %2445 = vmatprep.subr.bf16.mxu0 %v2127
        %2446 = vmatpush1.bf16.msra.mxu0 %v2126
        %2447 = vmatprep.subr.bf16.mxu0 %v2129
        %2448 = vmatpush1.bf16.msra.mxu0 %v2128
        %2449 = vmatprep.subr.bf16.mxu0 %v2131
        %2450 = vmatpush1.bf16.msra.mxu0 %v2130
        %2451 = vmatprep.subr.bf16.mxu0 %v2133
        %2452 = vmatpush1.bf16.msra.mxu0 %v2132
        %2453 = vmatprep.subr.bf16.mxu0 %v2135
        %2454 = vmatpush1.bf16.msra.mxu0 %v2134
        %2455 = vmatprep.subr.bf16.mxu0 %v2137
        %2456 = vmatpush1.bf16.msra.mxu0 %v2136
        %2457 = vmatprep.subr.bf16.mxu0 %v2139
        %2458 = vmatpush1.bf16.msra.mxu0 %v2138
        %2459 = vmatprep.subr.bf16.mxu0 %v2141
        %2460 = vmatpush1.bf16.msra.mxu0 %v2140
        %2461 = vmatprep.mubr.bf16.mxu0 %v1482
        %2462 = vmatmul.mubr.bf16.gmra.mrb[0].mxu0 %v1481
        %v2463 = vpop.f32.mrb[0].mxu0
        %v2464 = vadd.f32 %v2411, %v2463
        %v2465 = vpop.f32.mrb[0].mxu0
        %v2466 = vadd.f32 %v2413, %v2465
        %v2467 = vpop.f32.mrb[0].mxu0
        %v2468 = vadd.f32 %v2415, %v2467
        %v2469 = vpop.f32.mrb[0].mxu0
        %v2470 = vadd.f32 %v2417, %v2469
        %2471 = vmatprep.mubr.bf16.mxu0 %v1490
        %2472 = vmatmul.mubr.bf16.gmra.mrb[0].mxu0 %v1489
        %v2473 = vpop.f32.mrb[0].mxu0
        %v2474 = vadd.f32 %v2421, %v2473
        %v2475 = vpop.f32.mrb[0].mxu0
        %v2476 = vadd.f32 %v2423, %v2475
        %v2477 = vpop.f32.mrb[0].mxu0
        %v2478 = vadd.f32 %v2425, %v2477
        %v2479 = vpop.f32.mrb[0].mxu0
        %v2480 = vadd.f32 %v2427, %v2479
        %2481 = vdwg.mxu0
        %2482 = vst [vmem:[%s294] sm:$0xff] %v2464
        %2483 = vst [vmem:[%s294 + $0x8] sm:$0xff] %v2466
        %2484 = vst [vmem:[%s294 + $0x10] sm:$0xff] %v2468
        %2485 = vst [vmem:[%s294 + $0x18] sm:$0xff] %v2470
        %2486 = vst [vmem:[%s294 + $0x20] sm:$0xff] %v2474
        %2487 = vst [vmem:[%s294 + $0x28] sm:$0xff] %v2476
        %2488 = vst [vmem:[%s294 + $0x30] sm:$0xff] %v2478
        %2489 = vst [vmem:[%s294 + $0x38] sm:$0xff] %v2480
        %p2490 = scmp.lt.s32.totalorder %s21, 1
        %s2491 = scalar_select %p2490, %s21, 1
        %s2492 = smul.addr %s2491, 8
        %s2493 = smul.addr %s2492, 8
        %s2494 = scalar_lea.vmem %s4, %s2493
        // Predicated region
        $region45: #{cross_attention_layer_forward.1} parent=35 // pred_check
          %p2495 = pneg %p143
        $region46: #{cross_attention_layer_forward.1} parent=35 // pred_check_branch
          %2497 = sbr.rel (%p2495) target = $region48
        $region47: #{cross_attention_layer_forward.1} parent=35 // pred_region
          _
        $region48: #{cross_attention_layer_forward.1} parent=35 // pred_fallthru
          _
      $region36: #{cross_attention_layer_forward.1} parent=5 // pred_fallthru
        _
      %p2498 = scmp.le.s32.totalorder 2, %s16
      // Predicated region
      $region49: #{cross_attention_layer_forward.1} parent=5 // pred_check
        %p2499 = pneg %p2498
      $region50: #{cross_attention_layer_forward.1} parent=5 // pred_check_branch
        %2501 = sbr.rel (%p2499) target = $region52
      $region51: #{cross_attention_layer_forward.1} parent=5 // pred_region
        %s2502 = ssub.s32 %s16, 2
        // Predicated region
        $region53: #{cross_attention_layer_forward.1} parent=51 // pred_check
          %p2503 = pneg %p149
        $region54: #{cross_attention_layer_forward.1} parent=51 // pred_check_branch
          %2505 = sbr.rel (%p2503) target = $region56
        $region55: #{cross_attention_layer_forward.1} parent=51 // pred_region
          %p2506 = scmp.lt.s32.totalorder %s22, 1
          %s2507 = scalar_select %p2506, %s22, 1
          %s2508 = smul.addr %s2507, 8
          %s2509 = smul.addr %s2508, 8
          %s2510 = scalar_lea.vmem %s4, %s2509
        $region56: #{cross_attention_layer_forward.1} parent=51 // pred_fallthru
          _
      $region52: #{cross_attention_layer_forward.1} parent=5 // pred_fallthru
        _
    $region6: #{cross_attention_layer_forward.1} parent=1 // loop_footer
      %s20 = sadd.s32 1, %s16
    $region7: #{cross_attention_layer_forward.1} parent=1 // loop_footer_branch
      %15 = sbr.rel target = $region3
    $region8: #{cross_attention_layer_forward.1} parent=1 // loop_exit
      _
    %2511 = vsyncpa [#allocation3], 1
    %s2512 = scalar_lea.sflag [#allocation3], 1
    %2513 = vsyncpa %s2512, 1
    %2514 = vsyncpa [#allocation5], 1
    %s2515 = scalar_lea.sflag [#allocation5], 1
    %2516 = vsyncpa %s2515, 1

</llo_original>
